<compile_context>
chip_gen: v7x
topology: tpu7x:2x2x1
jax: 0.10.0
libtpu: 0.0.40
codegen_flags: <defaults>
</compile_context>

<pallas_src>
import functools

import jax
import jax.numpy as jnp
from jax import lax
from jax.experimental import pallas as pl
from jax.experimental.pallas import tpu as pltpu

LANE = 128


# ----------------------------- small helpers -----------------------------

def _round_up(v, m):
    return ((v + m - 1) // m) * m


def _vmem_limit(est_bytes):
    # ~3/4 of physical VMEM: ~48 MiB on v7x (64 MiB/TC), ~96 MiB on v5e/v6e (128 MiB).
    try:
        phys = pltpu.get_tpu_info().vmem_capacity_bytes
    except Exception:
        phys = 64 << 20
    cap = int(phys) * 3 // 4
    return int(max(16 << 20, min(cap, int(est_bytes) * 2 + (1 << 20))))


def _pad2(w, rows, cols):
    r, c = w.shape
    return jnp.pad(w, ((0, rows - r), (0, cols - c)))


def _pad1(b, n):
    return jnp.pad(b, (0, n - b.shape[0]))


# ----------------------------- in-kernel building blocks -----------------------------

def _dinv_from_keep(a_bf, keep_col):
    # deg_i = keep_i * (sum_j A_ij * keep_j + 1)   (masked adjacency + self loop)
    nbr = jnp.dot(a_bf, keep_col.astype(jnp.bfloat16),
                  preferred_element_type=jnp.float32)          # exact (0/1, f32 acc)
    deg = keep_col * (nbr + 1.0)
    return jnp.where(deg > 0.0, lax.rsqrt(deg), 0.0)


def _gcn(a_bf, x, dinv, w, b, ws, bs):
    # Normalised GCNConv + its 1-wide score conv, sharing the VMEM-resident A:
    #   h     = relu( dinv * (A @ (dinv*(x@W)) + dinv*(x@W)) + b )
    #   score =       dinv * (A @ (dinv*(h@ws)) + dinv*(h@ws)) + bs
    f32 = jnp.float32
    z = dinv * jnp.dot(x, w, preferred_element_type=f32)                 # (N, Hp)
    agg = jnp.dot(a_bf, z.astype(jnp.bfloat16), preferred_element_type=f32)
    h = jnp.maximum(dinv * (agg + z) + b, 0.0)
    zs = dinv * jnp.dot(h, ws, preferred_element_type=f32)               # (N, 1)
    sagg = jnp.dot(a_bf, zs.astype(jnp.bfloat16), preferred_element_type=f32)
    score = dinv * (sagg + zs) + bs
    return h, score


def _pool_readout(h, s_col, s_row, keep_prev, bc, br, member, *, ratio, num_graphs):
    # SAGPool top-k (per-graph) + tanh gating + gmp/gap readout.
    # (N,N) boolean masks never leave vregs; rank / n_per / counts are MXU matvecs.
    f32 = jnp.float32
    n = h.shape[0]
    alive = keep_prev > 0.5                                              # (N,1)
    same = bc == br                                                      # (N,N)
    ri = lax.broadcasted_iota(jnp.int32, (n, n), 0)
    cj = lax.broadcasted_iota(jnp.int32, (n, n), 1)
    higher = (s_row > s_col) | ((s_row == s_col) & (cj < ri))            # tie: lower idx wins
    keep_bf = keep_prev.astype(jnp.bfloat16)
    rank = jnp.dot(jnp.where(same & higher, 1.0, 0.0).astype(jnp.bfloat16),
                   keep_bf, preferred_element_type=f32)                  # (N,1)
    nper = jnp.dot(jnp.where(same, 1.0, 0.0).astype(jnp.bfloat16),
                   keep_bf, preferred_element_type=f32)                  # (N,1)
    new_keep = jnp.where(alive & (rank < jnp.ceil(ratio * nper)), 1.0, 0.0)
    x_new = h * jnp.tanh(s_col) * new_keep                               # SAGPool gating

    cnt = jnp.dot(member, new_keep, preferred_element_type=f32)          # (G,1)
    inv = jnp.where(cnt > 0.0, 1.0 / cnt, 0.0)
    mean = jnp.dot(member, x_new, preferred_element_type=f32) * inv      # gap
    rows = []
    for g in range(num_graphs):                                          # G static & small
        mask_g = (bc == g) & (new_keep > 0.5)                            # (N,1)
        rows.append(jnp.max(jnp.where(mask_g, x_new, f32(-1e30)),
                            axis=0, keepdims=True))                      # (1,Hp)
    mx = jnp.where(cnt > 0.0, jnp.concatenate(rows, axis=0), 0.0)        # gmp; empty graph -> 0
    return x_new, new_keep, mx, mean


# ----------------------------- kernels -----------------------------

def _layer1_kernel(a_ref, x_ref, w_ref, b_ref, ws_ref, bs_ref, h_ref, s_ref):
    # conv1 + score-conv1 with A resident in VMEM (single HBM read of A).
    a = a_ref[...].astype(jnp.float32).astype(jnp.bfloat16)   # int8 0/1 -> bf16 (exact)
    n = a.shape[0]
    keep = jnp.ones((n, 1), jnp.float32)                      # all nodes alive initially
    dinv = _dinv_from_keep(a, keep)
    h, score = _gcn(a, x_ref[...], dinv, w_ref[...], b_ref[...], ws_ref[...], bs_ref[...])
    h_ref[...] = h.astype(jnp.bfloat16)
    s_ref[...] = score


def _pool_layer_kernel(a_ref, h_ref, s_col_ref, s_row_ref, keep_ref, bc_ref, br_ref,
                       mem_ref, w_ref, b_ref, ws_ref, bs_ref,
                       mx_ref, mn_ref, ho_ref, so_ref, ko_ref, *, ratio, num_graphs):
    # pool_l + readout_l + conv_{l+1} + score-conv_{l+1}, one HBM read of A.
    a = a_ref[...].astype(jnp.float32).astype(jnp.bfloat16)
    h = h_ref[...].astype(jnp.float32)
    x_new, new_keep, mx, mean = _pool_readout(
        h, s_col_ref[...], s_row_ref[...], keep_ref[...], bc_ref[...], br_ref[...],
        mem_ref[...], ratio=ratio, num_graphs=num_graphs)
    mx_ref[...] = mx
    mn_ref[...] = mean
    ko_ref[...] = new_keep
    dinv = _dinv_from_keep(a, new_keep)                        # A already in VMEM: free
    h_next, score = _gcn(a, x_new, dinv, w_ref[...], b_ref[...], ws_ref[...], bs_ref[...])
    ho_ref[...] = h_next.astype(jnp.bfloat16)
    so_ref[...] = score


def _tail_kernel(h_ref, s_col_ref, s_row_ref, keep_ref, bc_ref, br_ref, mem_ref,
                 mx1_ref, mn1_ref, mx2_ref, mn2_ref,
                 w1a_ref, w1b_ref, b1_ref, w2_ref, b2_ref, w3_ref, b3_ref,
                 logp_ref, prop_ref, *, ratio, num_graphs):
    # pool3 + readout3 + s1+s2+s3 + lin1/lin2/lin3 + softmax / log_softmax.
    f32 = jnp.float32
    h = h_ref[...].astype(f32)
    _, _, mx3, mn3 = _pool_readout(
        h, s_col_ref[...], s_row_ref[...], keep_ref[...], bc_ref[...], br_ref[...],
        mem_ref[...], ratio=ratio, num_graphs=num_graphs)
    mx = mx1_ref[...] + mx2_ref[...] + mx3                     # gmp halves of x1+x2+x3
    mn = mn1_ref[...] + mn2_ref[...] + mn3                     # gap halves of x1+x2+x3
    hh = jnp.maximum(jnp.dot(mx, w1a_ref[...], preferred_element_type=f32)
                     + jnp.dot(mn, w1b_ref[...], preferred_element_type=f32)
                     + b1_ref[...], 0.0)
    # TODO(synk): F.dropout(p=dropout_ratio) omitted -> eval-mode (identity) semantics.
    hh = jnp.maximum(jnp.dot(hh, w2_ref[...], preferred_element_type=f32)
                     + b2_ref[...], 0.0)
    logits = jnp.dot(hh, w3_ref[...], preferred_element_type=f32) + b3_ref[...]
    z = logits - jnp.max(logits, axis=-1, keepdims=True)
    ez = jnp.exp(z)
    se = jnp.sum(ez, axis=-1, keepdims=True)
    prop_ref[...] = ez / se                                    # exact softmax (torch parity)
    logp_ref[...] = z - jnp.log(se)                            # log_softmax


# ----------------------------- pallas_call wrappers -----------------------------

def fused_layer1(a_i8, xp, w, b, ws, bs):
    n = xp.shape[0]
    hp = w.shape[1]
    est = 8 * n * n + 16 * n * hp + 8 * n * xp.shape[1]
    return pl.pallas_call(
        _layer1_kernel,
        out_shape=(jax.ShapeDtypeStruct((n, hp), jnp.bfloat16),   # h1
                   jax.ShapeDtypeStruct((n, 1), jnp.float32)),    # score1
        compiler_params=pltpu.CompilerParams(vmem_limit_bytes=_vmem_limit(est)),
    )(a_i8, xp, w, b.reshape(1, -1), ws, bs.reshape(1, 1))


def fused_pool_layer(a_i8, h, s, keep, bc, br, member, w, b, ws, bs, *, num_graphs, ratio):
    n, hp = h.shape
    g = member.shape[0]
    est = 12 * n * n + 24 * n * hp
    kern = functools.partial(_pool_layer_kernel, ratio=float(ratio),
                             num_graphs=int(num_graphs))
    return pl.pallas_call(
        kern,
        out_shape=(jax.ShapeDtypeStruct((g, hp), jnp.float32),    # gmp readout
                   jax.ShapeDtypeStruct((g, hp), jnp.float32),    # gap readout
                   jax.ShapeDtypeStruct((n, hp), jnp.bfloat16),   # next-layer features
                   jax.ShapeDtypeStruct((n, 1), jnp.float32),     # next-layer score
                   jax.ShapeDtypeStruct((n, 1), jnp.float32)),    # new keep mask
        compiler_params=pltpu.CompilerParams(vmem_limit_bytes=_vmem_limit(est)),
    )(a_i8, h, s.reshape(n, 1), s.reshape(1, n), keep, bc, br, member,
      w, b.reshape(1, -1), ws, bs.reshape(1, 1))


def fused_tail(h, s, keep, bc, br, member, mx1, mn1, mx2, mn2, params, *,
               num_graphs, ratio):
    n, hp = h.shape
    g = member.shape[0]
    c = params["lw3"].shape[1]
    est = 8 * n * n + 16 * n * hp
    kern = functools.partial(_tail_kernel, ratio=float(ratio),
                             num_graphs=int(num_graphs))
    return pl.pallas_call(
        kern,
        out_shape=(jax.ShapeDtypeStruct((g, c), jnp.float32),     # log_softmax
                   jax.ShapeDtypeStruct((g, c), jnp.float32)),    # softmax probs
        compiler_params=pltpu.CompilerParams(vmem_limit_bytes=_vmem_limit(est)),
    )(h, s.reshape(n, 1), s.reshape(1, n), keep, bc, br, member,
      mx1, mn1, mx2, mn2,
      params["lw1a"], params["lw1b"], params["lb1"].reshape(1, -1),
      params["lw2"], params["lb2"].reshape(1, -1),
      params["lw3"], params["lb3"].reshape(1, -1))


# ----------------------------- full forward pass -----------------------------

def net_forward(params, xp, a_i8, batch, *, num_graphs, ratio):
    n = xp.shape[0]
    bc = batch.reshape(n, 1).astype(jnp.int32)                    # batch as column
    br = batch.reshape(1, n).astype(jnp.int32)                    # batch as row
    member = (batch[None, :] ==
              jnp.arange(num_graphs, dtype=batch.dtype)[:, None]).astype(jnp.float32)
    keep = jnp.ones((n, 1), jnp.float32)

    # K1: conv1 + score-conv1
    h, s = fused_layer1(a_i8, xp, params["w1"], params["b1"], params["ws1"], params["bs1"])

    # K2: pool1 + readout1 + conv2 + score-conv2 ; K3: pool2 + readout2 + conv3 + score-conv3
    readouts = []
    for l in (2, 3):
        mx, mn, h, s, keep = fused_pool_layer(
            a_i8, h, s, keep, bc, br, member,
            params[f"w{l}"], params[f"b{l}"], params[f"ws{l}"], params[f"bs{l}"],
            num_graphs=num_graphs, ratio=ratio)
        readouts.append((mx, mn))
    (mx1, mn1), (mx2, mn2) = readouts

    # K4: pool3 + readout3 + fused MLP head
    logp, prop = fused_tail(h, s, keep, bc, br, member, mx1, mn1, mx2, mn2, params,
                            num_graphs=num_graphs, ratio=ratio)
    # TODO(synk): reference code returns undefined `prop`; softmax probs returned
    # (prop_s == prop_f in the reference).
    return logp, prop


# ----------------------------- parameter init / padding -----------------------------

def init_params(key, num_features, nhid, num_classes):
    def lin(k, fan_in, fan_out):
        kw, kb = jax.random.split(k)
        lim = 1.0 / (fan_in ** 0.5)
        w = jax.random.uniform(kw, (fan_in, fan_out), jnp.float32, -lim, lim)
        b = jax.random.uniform(kb, (fan_out,), jnp.float32, -lim, lim)
        return w, b

    keys = jax.random.split(key, 9)
    p = {}
    p["w1"], p["b1"] = lin(keys[0], num_features, nhid)         # conv1
    p["ws1"], p["bs1"] = lin(keys[1], nhid, 1)                  # pool1 score conv
    p["w2"], p["b2"] = lin(keys[2], nhid, nhid)                 # conv2
    p["ws2"], p["bs2"] = lin(keys[3], nhid, 1)                  # pool2 score conv
    p["w3"], p["b3"] = lin(keys[4], nhid, nhid)                 # conv3
    p["ws3"], p["bs3"] = lin(keys[5], nhid, 1)                  # pool3 score conv
    p["lw1"], p["lb1"] = lin(keys[6], 2 * nhid, nhid)           # lin1
    p["lw2"], p["lb2"] = lin(keys[7], nhid, nhid // 2)          # lin2
    p["lw3"], p["lb3"] = lin(keys[8], nhid // 2, num_classes)   # lin3
    return p


def pad_params(p, num_features, nhid):
    """Zero-pad feature widths to the 128-lane boundary (lane-dense stores, full MXU
    tiles). Padded lanes stay exactly zero through the whole network, so the head
    output is numerically identical to the unpadded computation."""
    hp = _round_up(nhid, LANE)
    fp = _round_up(num_features, LANE)
    q = {}
    q["w1"], q["b1"] = _pad2(p["w1"], fp, hp), _pad1(p["b1"], hp)
    q["w2"], q["b2"] = _pad2(p["w2"], hp, hp), _pad1(p["b2"], hp)
    q["w3"], q["b3"] = _pad2(p["w3"], hp, hp), _pad1(p["b3"], hp)
    for i in (1, 2, 3):
        q[f"ws{i}"] = _pad2(p[f"ws{i}"], hp, 1)     # narrow (Hp,1) score weight
        q[f"bs{i}"] = p[f"bs{i}"]
    q["lw1a"] = _pad2(p["lw1"][:nhid], hp, nhid)    # gmp half of lin1
    q["lw1b"] = _pad2(p["lw1"][nhid:], hp, nhid)    # gap half of lin1
    q["lb1"] = p["lb1"]
    q["lw2"], q["lb2"] = p["lw2"], p["lb2"]
    q["lw3"], q["lb3"] = p["lw3"], p["lb3"]
    return q


# ----------------------------- main -----------------------------

if __name__ == "__main__":
    N, F, H, C, G = 16, 8, 32, 4, 2          # nodes, num_features, nhid, num_classes, graphs
    POOLING_RATIO = 0.5

    key = jax.random.PRNGKey(0)
    k_feat, k_adj, k_param = jax.random.split(key, 3)

    x = jax.random.normal(k_feat, (N, F), jnp.float32)

    per = N // G
    blocks = []
    for g in range(G):
        kg = jax.random.fold_in(k_adj, g)
        blk = (jax.random.uniform(kg, (per, per)) < 0.4).astype(jnp.float32)
        blk = jnp.triu(blk, 1)
        blocks.append(blk + blk.T)
    a_raw = jax.scipy.linalg.block_diag(*blocks)              # (N, N) block-diag per graph
    a_i8 = a_raw.astype(jnp.int8)                             # 0/1 adjacency, int8 in HBM
    batch = jnp.repeat(jnp.arange(G, dtype=jnp.int32), per)   # (N,)

    params = pad_params(init_params(k_param, F, H, C), F, H)
    xp = jnp.pad(x, ((0, 0), (0, _round_up(F, LANE) - F)))    # lane-dense node features

    fwd = jax.jit(functools.partial(net_forward, num_graphs=G, ratio=POOLING_RATIO))
    logp, prop = fwd(params, xp, a_i8, batch)
    jax.block_until_ready((logp, prop))

    assert logp.shape == (G, C) and prop.shape == (G, C)
    assert bool(jnp.all(jnp.isfinite(logp))) and bool(jnp.all(jnp.isfinite(prop)))
    print("KERNEL_OK")
</pallas_src>

<mosaic_0001>
module attributes {stable_mosaic.version = 11 : i64} {
  func.func @_layer1_kernel(%arg0: memref<16x16xi8, #tpu.memory_space<vmem>>, %arg1: memref<16x128xf32, #tpu.memory_space<vmem>>, %arg2: memref<128x128xf32, #tpu.memory_space<vmem>>, %arg3: memref<1x128xf32, #tpu.memory_space<vmem>>, %arg4: memref<128x1xf32, #tpu.memory_space<vmem>>, %arg5: memref<1x1xf32, #tpu.memory_space<vmem>>, %arg6: memref<16x128xbf16, #tpu.memory_space<vmem>>, %arg7: memref<16x1xf32, #tpu.memory_space<vmem>>) attributes {dimension_semantics = [], scalar_prefetch = 0 : i64, scratch_operands = 0 : i64, tpu.core_type = #tpu.core_type<tc>} {
    %c0 = arith.constant 0 : index
    %c0_0 = arith.constant 0 : index
    %0 = vector.load %arg0[%c0, %c0_0] : memref<16x16xi8, #tpu.memory_space<vmem>>, vector<16x16xi8>
    %1 = arith.sitofp %0 : vector<16x16xi8> to vector<16x16xf32>
    %2 = arith.truncf %1 : vector<16x16xf32> to vector<16x16xbf16>
    %cst = arith.constant 1.000000e+00 : f32
    %3 = vector.broadcast %cst : f32 to vector<16x1xf32>
    %4 = arith.truncf %3 : vector<16x1xf32> to vector<16x1xbf16>
    %cst_1 = arith.constant dense<0.000000e+00> : vector<16x1xf32>
    %5 = tpu.matmul %2, %4, %cst_1 {dimension_numbers = #tpu.dot_dimension_numbers<[1], [0], [0], [1], [0, 0, 1, 1], [], []>} : vector<16x16xbf16>, vector<16x1xbf16>, vector<16x1xf32> -> vector<16x1xf32>
    %cst_2 = arith.constant 1.000000e+00 : f32
    %6 = vector.broadcast %cst_2 : f32 to vector<16x1xf32>
    %7 = arith.addf %5, %6 : vector<16x1xf32>
    %8 = arith.mulf %3, %7 : vector<16x1xf32>
    %cst_3 = arith.constant 0.000000e+00 : f32
    %9 = vector.broadcast %cst_3 : f32 to vector<16x1xf32>
    %10 = arith.cmpf ogt, %8, %9 : vector<16x1xf32>
    %11 = math.rsqrt %8 : vector<16x1xf32>
    %cst_4 = arith.constant 0.000000e+00 : f32
    %12 = vector.broadcast %cst_4 : f32 to vector<16x1xf32>
    %13 = arith.select %10, %11, %12 : vector<16x1xi1>, vector<16x1xf32>
    %c0_5 = arith.constant 0 : index
    %c0_6 = arith.constant 0 : index
    %14 = vector.load %arg1[%c0_5, %c0_6] : memref<16x128xf32, #tpu.memory_space<vmem>>, vector<16x128xf32>
    %c0_7 = arith.constant 0 : index
    %c0_8 = arith.constant 0 : index
    %15 = vector.load %arg2[%c0_7, %c0_8] : memref<128x128xf32, #tpu.memory_space<vmem>>, vector<128x128xf32>
    %c0_9 = arith.constant 0 : index
    %c0_10 = arith.constant 0 : index
    %16 = vector.load %arg3[%c0_9, %c0_10] : memref<1x128xf32, #tpu.memory_space<vmem>>, vector<1x128xf32>
    %c0_11 = arith.constant 0 : index
    %c0_12 = arith.constant 0 : index
    %17 = vector.load %arg4[%c0_11, %c0_12] : memref<128x1xf32, #tpu.memory_space<vmem>>, vector<128x1xf32>
    %c0_13 = arith.constant 0 : index
    %c0_14 = arith.constant 0 : index
    %18 = vector.load %arg5[%c0_13, %c0_14] : memref<1x1xf32, #tpu.memory_space<vmem>>, vector<1x1xf32>
    %cst_15 = arith.constant dense<0.000000e+00> : vector<16x128xf32>
    %19 = tpu.matmul %14, %15, %cst_15 {dimension_numbers = #tpu.dot_dimension_numbers<[1], [0], [0], [1], [0, 0, 1, 1], [], []>} : vector<16x128xf32>, vector<128x128xf32>, vector<16x128xf32> -> vector<16x128xf32>
    %20 = vector.broadcast %13 : vector<16x1xf32> to vector<16x128xf32>
    %21 = arith.mulf %20, %19 : vector<16x128xf32>
    %22 = arith.truncf %21 : vector<16x128xf32> to vector<16x128xbf16>
    %cst_16 = arith.constant dense<0.000000e+00> : vector<16x128xf32>
    %23 = tpu.matmul %2, %22, %cst_16 {dimension_numbers = #tpu.dot_dimension_numbers<[1], [0], [0], [1], [0, 0, 1, 1], [], []>} : vector<16x16xbf16>, vector<16x128xbf16>, vector<16x128xf32> -> vector<16x128xf32>
    %24 = arith.addf %23, %21 : vector<16x128xf32>
    %25 = vector.broadcast %13 : vector<16x1xf32> to vector<16x128xf32>
    %26 = arith.mulf %25, %24 : vector<16x128xf32>
    %27 = vector.broadcast %16 : vector<1x128xf32> to vector<16x128xf32>
    %28 = arith.addf %26, %27 : vector<16x128xf32>
    %cst_17 = arith.constant 0.000000e+00 : f32
    %29 = vector.broadcast %cst_17 : f32 to vector<16x128xf32>
    %30 = arith.maximumf %28, %29 : vector<16x128xf32>
    %cst_18 = arith.constant dense<0.000000e+00> : vector<16x1xf32>
    %31 = tpu.matmul %30, %17, %cst_18 {dimension_numbers = #tpu.dot_dimension_numbers<[1], [0], [0], [1], [0, 0, 1, 1], [], []>} : vector<16x128xf32>, vector<128x1xf32>, vector<16x1xf32> -> vector<16x1xf32>
    %32 = arith.mulf %13, %31 : vector<16x1xf32>
    %33 = arith.truncf %32 : vector<16x1xf32> to vector<16x1xbf16>
    %cst_19 = arith.constant dense<0.000000e+00> : vector<16x1xf32>
    %34 = tpu.matmul %2, %33, %cst_19 {dimension_numbers = #tpu.dot_dimension_numbers<[1], [0], [0], [1], [0, 0, 1, 1], [], []>} : vector<16x16xbf16>, vector<16x1xbf16>, vector<16x1xf32> -> vector<16x1xf32>
    %35 = arith.addf %34, %32 : vector<16x1xf32>
    %36 = arith.mulf %13, %35 : vector<16x1xf32>
    %37 = vector.broadcast %18 : vector<1x1xf32> to vector<16x1xf32>
    %38 = arith.addf %36, %37 : vector<16x1xf32>
    %39 = arith.truncf %30 : vector<16x128xf32> to vector<16x128xbf16>
    %c0_20 = arith.constant 0 : index
    %c0_21 = arith.constant 0 : index
    %40 = vector.load %arg6[%c0_20, %c0_21] : memref<16x128xbf16, #tpu.memory_space<vmem>>, vector<16x128xbf16>
    tpu.vector_store %arg6[%c0_20, %c0_21], %39 {strides = array<i32>} : memref<16x128xbf16, #tpu.memory_space<vmem>>, vector<16x128xbf16>,
    %c0_22 = arith.constant 0 : index
    %c0_23 = arith.constant 0 : index
    %41 = vector.load %arg7[%c0_22, %c0_23] : memref<16x1xf32, #tpu.memory_space<vmem>>, vector<16x1xf32>
    tpu.vector_store %arg7[%c0_22, %c0_23], %38 {strides = array<i32>} : memref<16x1xf32, #tpu.memory_space<vmem>>, vector<16x1xf32>,
    return
  }
}

module attributes {stable_mosaic.version = 11 : i64} {
  func.func @_tail_kernel(%arg0: memref<16x128xbf16, #tpu.memory_space<vmem>>, %arg1: memref<16x1xf32, #tpu.memory_space<vmem>>, %arg2: memref<1x16xf32, #tpu.memory_space<vmem>>, %arg3: memref<16x1xf32, #tpu.memory_space<vmem>>, %arg4: memref<16x1xi32, #tpu.memory_space<vmem>>, %arg5: memref<1x16xi32, #tpu.memory_space<vmem>>, %arg6: memref<2x16xf32, #tpu.memory_space<vmem>>, %arg7: memref<2x128xf32, #tpu.memory_space<vmem>>, %arg8: memref<2x128xf32, #tpu.memory_space<vmem>>, %arg9: memref<2x128xf32, #tpu.memory_space<vmem>>, %arg10: memref<2x128xf32, #tpu.memory_space<vmem>>, %arg11: memref<128x32xf32, #tpu.memory_space<vmem>>, %arg12: memref<128x32xf32, #tpu.memory_space<vmem>>, %arg13: memref<1x32xf32, #tpu.memory_space<vmem>>, %arg14: memref<32x16xf32, #tpu.memory_space<vmem>>, %arg15: memref<1x16xf32, #tpu.memory_space<vmem>>, %arg16: memref<16x4xf32, #tpu.memory_space<vmem>>, %arg17: memref<1x4xf32, #tpu.memory_space<vmem>>, %arg18: memref<2x4xf32, #tpu.memory_space<vmem>>, %arg19: memref<2x4xf32, #tpu.memory_space<vmem>>) attributes {dimension_semantics = [], scalar_prefetch = 0 : i64, scratch_operands = 0 : i64, tpu.core_type = #tpu.core_type<tc>} {
    %c0 = arith.constant 0 : index
    %c0_0 = arith.constant 0 : index
    %0 = vector.load %arg0[%c0, %c0_0] : memref<16x128xbf16, #tpu.memory_space<vmem>>, vector<16x128xbf16>
    %1 = arith.extf %0 : vector<16x128xbf16> to vector<16x128xf32>
    %c0_1 = arith.constant 0 : index
    %c0_2 = arith.constant 0 : index
    %2 = vector.load %arg1[%c0_1, %c0_2] : memref<16x1xf32, #tpu.memory_space<vmem>>, vector<16x1xf32>
    %c0_3 = arith.constant 0 : index
    %c0_4 = arith.constant 0 : index
    %3 = vector.load %arg2[%c0_3, %c0_4] : memref<1x16xf32, #tpu.memory_space<vmem>>, vector<1x16xf32>
    %c0_5 = arith.constant 0 : index
    %c0_6 = arith.constant 0 : index
    %4 = vector.load %arg3[%c0_5, %c0_6] : memref<16x1xf32, #tpu.memory_space<vmem>>, vector<16x1xf32>
    %c0_7 = arith.constant 0 : index
    %c0_8 = arith.constant 0 : index
    %5 = vector.load %arg4[%c0_7, %c0_8] : memref<16x1xi32, #tpu.memory_space<vmem>>, vector<16x1xi32>
    %c0_9 = arith.constant 0 : index
    %c0_10 = arith.constant 0 : index
    %6 = vector.load %arg5[%c0_9, %c0_10] : memref<1x16xi32, #tpu.memory_space<vmem>>, vector<1x16xi32>
    %c0_11 = arith.constant 0 : index
    %c0_12 = arith.constant 0 : index
    %7 = vector.load %arg6[%c0_11, %c0_12] : memref<2x16xf32, #tpu.memory_space<vmem>>, vector<2x16xf32>
    %cst = arith.constant 5.000000e-01 : f32
    %8 = vector.broadcast %cst : f32 to vector<16x1xf32>
    %9 = arith.cmpf ogt, %4, %8 : vector<16x1xf32>
    %10 = vector.broadcast %5 : vector<16x1xi32> to vector<16x16xi32>
    %11 = vector.broadcast %6 : vector<1x16xi32> to vector<16x16xi32>
    %12 = arith.cmpi eq, %10, %11 : vector<16x16xi32>
    %13 = tpu.iota {dimensions = array<i32: 0>} : vector<16x16xi32>
    %14 = tpu.iota {dimensions = array<i32: 1>} : vector<16x16xi32>
    %15 = vector.broadcast %3 : vector<1x16xf32> to vector<16x16xf32>
    %16 = vector.broadcast %2 : vector<16x1xf32> to vector<16x16xf32>
    %17 = arith.cmpf ogt, %15, %16 : vector<16x16xf32>
    %18 = vector.broadcast %3 : vector<1x16xf32> to vector<16x16xf32>
    %19 = vector.broadcast %2 : vector<16x1xf32> to vector<16x16xf32>
    %20 = arith.cmpf oeq, %18, %19 : vector<16x16xf32>
    %21 = arith.cmpi slt, %14, %13 : vector<16x16xi32>
    %22 = arith.andi %20, %21 : vector<16x16xi1>
    %23 = arith.ori %17, %22 : vector<16x16xi1>
    %24 = arith.truncf %4 : vector<16x1xf32> to vector<16x1xbf16>
    %25 = arith.andi %12, %23 : vector<16x16xi1>
    %cst_13 = arith.constant 1.000000e+00 : f32
    %cst_14 = arith.constant 0.000000e+00 : f32
    %26 = vector.broadcast %cst_13 : f32 to vector<16x16xf32>
    %27 = vector.broadcast %cst_14 : f32 to vector<16x16xf32>
    %28 = arith.select %25, %26, %27 : vector<16x16xi1>, vector<16x16xf32>
    %29 = arith.truncf %28 : vector<16x16xf32> to vector<16x16xbf16>
    %cst_15 = arith.constant dense<0.000000e+00> : vector<16x1xf32>
    %30 = tpu.matmul %29, %24, %cst_15 {dimension_numbers = #tpu.dot_dimension_numbers<[1], [0], [0], [1], [0, 0, 1, 1], [], []>} : vector<16x16xbf16>, vector<16x1xbf16>, vector<16x1xf32> -> vector<16x1xf32>
    %cst_16 = arith.constant 1.000000e+00 : f32
    %cst_17 = arith.constant 0.000000e+00 : f32
    %31 = vector.broadcast %cst_16 : f32 to vector<16x16xf32>
    %32 = vector.broadcast %cst_17 : f32 to vector<16x16xf32>
    %33 = arith.select %12, %31, %32 : vector<16x16xi1>, vector<16x16xf32>
    %34 = arith.truncf %33 : vector<16x16xf32> to vector<16x16xbf16>
    %cst_18 = arith.constant dense<0.000000e+00> : vector<16x1xf32>
    %35 = tpu.matmul %34, %24, %cst_18 {dimension_numbers = #tpu.dot_dimension_numbers<[1], [0], [0], [1], [0, 0, 1, 1], [], []>} : vector<16x16xbf16>, vector<16x1xbf16>, vector<16x1xf32> -> vector<16x1xf32>
    %cst_19 = arith.constant 5.000000e-01 : f32
    %36 = vector.broadcast %cst_19 : f32 to vector<16x1xf32>
    %37 = arith.mulf %36, %35 : vector<16x1xf32>
    %38 = math.ceil %37 : vector<16x1xf32>
    %39 = arith.cmpf olt, %30, %38 : vector<16x1xf32>
    %40 = arith.andi %9, %39 : vector<16x1xi1>
    %cst_20 = arith.constant 1.000000e+00 : f32
    %cst_21 = arith.constant 0.000000e+00 : f32
    %41 = vector.broadcast %cst_20 : f32 to vector<16x1xf32>
    %42 = vector.broadcast %cst_21 : f32 to vector<16x1xf32>
    %43 = arith.select %40, %41, %42 : vector<16x1xi1>, vector<16x1xf32>
    %44 = math.tanh %2 : vector<16x1xf32>
    %45 = vector.broadcast %44 : vector<16x1xf32> to vector<16x128xf32>
    %46 = arith.mulf %1, %45 : vector<16x128xf32>
    %47 = vector.broadcast %43 : vector<16x1xf32> to vector<16x128xf32>
    %48 = arith.mulf %46, %47 : vector<16x128xf32>
    %cst_22 = arith.constant dense<0.000000e+00> : vector<2x1xf32>
    %49 = tpu.matmul %7, %43, %cst_22 {dimension_numbers = #tpu.dot_dimension_numbers<[1], [0], [0], [1], [0, 0, 1, 1], [], []>} : vector<2x16xf32>, vector<16x1xf32>, vector<2x1xf32> -> vector<2x1xf32>
    %cst_23 = arith.constant 0.000000e+00 : f32
    %50 = vector.broadcast %cst_23 : f32 to vector<2x1xf32>
    %51 = arith.cmpf ogt, %49, %50 : vector<2x1xf32>
    %cst_24 = arith.constant 1.000000e+00 : f32
    %52 = vector.broadcast %cst_24 : f32 to vector<2x1xf32>
    %53 = arith.divf %52, %49 : vector<2x1xf32>
    %cst_25 = arith.constant 0.000000e+00 : f32
    %54 = vector.broadcast %cst_25 : f32 to vector<2x1xf32>
    %55 = arith.select %51, %53, %54 : vector<2x1xi1>, vector<2x1xf32>
    %cst_26 = arith.constant dense<0.000000e+00> : vector<2x128xf32>
    %56 = tpu.matmul %7, %48, %cst_26 {dimension_numbers = #tpu.dot_dimension_numbers<[1], [0], [0], [1], [0, 0, 1, 1], [], []>} : vector<2x16xf32>, vector<16x128xf32>, vector<2x128xf32> -> vector<2x128xf32>
    %57 = vector.broadcast %55 : vector<2x1xf32> to vector<2x128xf32>
    %58 = arith.mulf %56, %57 : vector<2x128xf32>
    %c0_i32 = arith.constant 0 : i32
    %59 = vector.broadcast %c0_i32 : i32 to vector<16x1xi32>
    %60 = arith.cmpi eq, %5, %59 : vector<16x1xi32>
    %cst_27 = arith.constant 5.000000e-01 : f32
    %61 = vector.broadcast %cst_27 : f32 to vector<16x1xf32>
    %62 = arith.cmpf ogt, %43, %61 : vector<16x1xf32>
    %63 = arith.andi %60, %62 : vector<16x1xi1>
    %cst_28 = arith.constant -1.000000e+30 : f32
    %64 = vector.shape_cast %63 : vector<16x1xi1> to vector<16x1xi1>
    %65 = vector.broadcast %64 : vector<16x1xi1> to vector<16x128xi1>
    %66 = vector.broadcast %cst_28 : f32 to vector<16x128xf32>
    %67 = arith.select %65, %48, %66 : vector<16x128xi1>, vector<16x128xf32>
    %cst_29 = arith.constant dense<0xFF800000> : vector<128xf32>
    %68 = vector.multi_reduction <maximumf>, %67, %cst_29 [0] : vector<16x128xf32> to vector<128xf32>
    %69 = vector.shape_cast %68 : vector<128xf32> to vector<1x128xf32>
    %c1_i32 = arith.constant 1 : i32
    %70 = vector.broadcast %c1_i32 : i32 to vector<16x1xi32>
    %71 = arith.cmpi eq, %5, %70 : vector<16x1xi32>
    %cst_30 = arith.constant 5.000000e-01 : f32
    %72 = vector.broadcast %cst_30 : f32 to vector<16x1xf32>
    %73 = arith.cmpf ogt, %43, %72 : vector<16x1xf32>
    %74 = arith.andi %71, %73 : vector<16x1xi1>
    %cst_31 = arith.constant -1.000000e+30 : f32
    %75 = vector.shape_cast %74 : vector<16x1xi1> to vector<16x1xi1>
    %76 = vector.broadcast %75 : vector<16x1xi1> to vector<16x128xi1>
    %77 = vector.broadcast %cst_31 : f32 to vector<16x128xf32>
    %78 = arith.select %76, %48, %77 : vector<16x128xi1>, vector<16x128xf32>
    %cst_32 = arith.constant dense<0xFF800000> : vector<128xf32>
    %79 = vector.multi_reduction <maximumf>, %78, %cst_32 [0] : vector<16x128xf32> to vector<128xf32>
    %80 = vector.shape_cast %79 : vector<128xf32> to vector<1x128xf32>
    %cst_33 = arith.constant 0.000000e+00 : f32
    %81 = vector.broadcast %cst_33 : f32 to vector<2x1xf32>
    %82 = arith.cmpf ogt, %49, %81 : vector<2x1xf32>
    %83 = tpu.concatenate %69, %80 in 0 : vector<1x128xf32>, vector<1x128xf32> -> vector<2x128xf32>
    %cst_34 = arith.constant 0.000000e+00 : f32
    %84 = vector.shape_cast %82 : vector<2x1xi1> to vector<2x1xi1>
    %85 = vector.broadcast %84 : vector<2x1xi1> to vector<2x128xi1>
    %86 = vector.broadcast %cst_34 : f32 to vector<2x128xf32>
    %87 = arith.select %85, %83, %86 : vector<2x128xi1>, vector<2x128xf32>
    %c0_35 = arith.constant 0 : index
    %c0_36 = arith.constant 0 : index
    %88 = vector.load %arg7[%c0_35, %c0_36] : memref<2x128xf32, #tpu.memory_space<vmem>>, vector<2x128xf32>
    %c0_37 = arith.constant 0 : index
    %c0_38 = arith.constant 0 : index
    %89 = vector.load %arg9[%c0_37, %c0_38] : memref<2x128xf32, #tpu.memory_space<vmem>>, vector<2x128xf32>
    %90 = arith.addf %88, %89 : vector<2x128xf32>
    %91 = arith.addf %90, %87 : vector<2x128xf32>
    %c0_39 = arith.constant 0 : index
    %c0_40 = arith.constant 0 : index
    %92 = vector.load %arg8[%c0_39, %c0_40] : memref<2x128xf32, #tpu.memory_space<vmem>>, vector<2x128xf32>
    %c0_41 = arith.constant 0 : index
    %c0_42 = arith.constant 0 : index
    %93 = vector.load %arg10[%c0_41, %c0_42] : memref<2x128xf32, #tpu.memory_space<vmem>>, vector<2x128xf32>
    %94 = arith.addf %92, %93 : vector<2x128xf32>
    %95 = arith.addf %94, %58 : vector<2x128xf32>
    %c0_43 = arith.constant 0 : index
    %c0_44 = arith.constant 0 : index
    %96 = vector.load %arg11[%c0_43, %c0_44] : memref<128x32xf32, #tpu.memory_space<vmem>>, vector<128x32xf32>
    %cst_45 = arith.constant dense<0.000000e+00> : vector<2x32xf32>
    %97 = tpu.matmul %91, %96, %cst_45 {dimension_numbers = #tpu.dot_dimension_numbers<[1], [0], [0], [1], [0, 0, 1, 1], [], []>} : vector<2x128xf32>, vector<128x32xf32>, vector<2x32xf32> -> vector<2x32xf32>
    %c0_46 = arith.constant 0 : index
    %c0_47 = arith.constant 0 : index
    %98 = vector.load %arg12[%c0_46, %c0_47] : memref<128x32xf32, #tpu.memory_space<vmem>>, vector<128x32xf32>
    %cst_48 = arith.constant dense<0.000000e+00> : vector<2x32xf32>
    %99 = tpu.matmul %95, %98, %cst_48 {dimension_numbers = #tpu.dot_dimension_numbers<[1], [0], [0], [1], [0, 0, 1, 1], [], []>} : vector<2x128xf32>, vector<128x32xf32>, vector<2x32xf32> -> vector<2x32xf32>
    %100 = arith.addf %97, %99 : vector<2x32xf32>
    %c0_49 = arith.constant 0 : index
    %c0_50 = arith.constant 0 : index
    %101 = vector.load %arg13[%c0_49, %c0_50] : memref<1x32xf32, #tpu.memory_space<vmem>>, vector<1x32xf32>
    %102 = vector.broadcast %101 : vector<1x32xf32> to vector<2x32xf32>
    %103 = arith.addf %100, %102 : vector<2x32xf32>
    %cst_51 = arith.constant 0.000000e+00 : f32
    %104 = vector.broadcast %cst_51 : f32 to vector<2x32xf32>
    %105 = arith.maximumf %103, %104 : vector<2x32xf32>
    %c0_52 = arith.constant 0 : index
    %c0_53 = arith.constant 0 : index
    %106 = vector.load %arg14[%c0_52, %c0_53] : memref<32x16xf32, #tpu.memory_space<vmem>>, vector<32x16xf32>
    %cst_54 = arith.constant dense<0.000000e+00> : vector<2x16xf32>
    %107 = tpu.matmul %105, %106, %cst_54 {dimension_numbers = #tpu.dot_dimension_numbers<[1], [0], [0], [1], [0, 0, 1, 1], [], []>} : vector<2x32xf32>, vector<32x16xf32>, vector<2x16xf32> -> vector<2x16xf32>
    %c0_55 = arith.constant 0 : index
    %c0_56 = arith.constant 0 : index
    %108 = vector.load %arg15[%c0_55, %c0_56] : memref<1x16xf32, #tpu.memory_space<vmem>>, vector<1x16xf32>
    %109 = vector.broadcast %108 : vector<1x16xf32> to vector<2x16xf32>
    %110 = arith.addf %107, %109 : vector<2x16xf32>
    %cst_57 = arith.constant 0.000000e+00 : f32
    %111 = vector.broadcast %cst_57 : f32 to vector<2x16xf32>
    %112 = arith.maximumf %110, %111 : vector<2x16xf32>
    %c0_58 = arith.constant 0 : index
    %c0_59 = arith.constant 0 : index
    %113 = vector.load %arg16[%c0_58, %c0_59] : memref<16x4xf32, #tpu.memory_space<vmem>>, vector<16x4xf32>
    %cst_60 = arith.constant dense<0.000000e+00> : vector<2x4xf32>
    %114 = tpu.matmul %112, %113, %cst_60 {dimension_numbers = #tpu.dot_dimension_numbers<[1], [0], [0], [1], [0, 0, 1, 1], [], []>} : vector<2x16xf32>, vector<16x4xf32>, vector<2x4xf32> -> vector<2x4xf32>
    %c0_61 = arith.constant 0 : index
    %c0_62 = arith.constant 0 : index
    %115 = vector.load %arg17[%c0_61, %c0_62] : memref<1x4xf32, #tpu.memory_space<vmem>>, vector<1x4xf32>
    %116 = vector.broadcast %115 : vector<1x4xf32> to vector<2x4xf32>
    %117 = arith.addf %114, %116 : vector<2x4xf32>
    %cst_63 = arith.constant dense<0xFF800000> : vector<2xf32>
    %118 = vector.multi_reduction <maximumf>, %117, %cst_63 [1] : vector<2x4xf32> to vector<2xf32>
    %119 = vector.shape_cast %118 : vector<2xf32> to vector<2x1xf32>
    %120 = vector.broadcast %119 : vector<2x1xf32> to vector<2x4xf32>
    %121 = arith.subf %117, %120 : vector<2x4xf32>
    %122 = math.exp %121 : vector<2x4xf32>
    %cst_64 = arith.constant dense<0.000000e+00> : vector<2xf32>
    %123 = vector.multi_reduction <add>, %122, %cst_64 [1] : vector<2x4xf32> to vector<2xf32>
    %124 = vector.shape_cast %123 : vector<2xf32> to vector<2x1xf32>
    %125 = vector.broadcast %124 : vector<2x1xf32> to vector<2x4xf32>
    %126 = arith.divf %122, %125 : vector<2x4xf32>
    %c0_65 = arith.constant 0 : index
    %c0_66 = arith.constant 0 : index
    %127 = vector.load %arg19[%c0_65, %c0_66] : memref<2x4xf32, #tpu.memory_space<vmem>>, vector<2x4xf32>
    tpu.vector_store %arg19[%c0_65, %c0_66], %126 {strides = array<i32>} : memref<2x4xf32, #tpu.memory_space<vmem>>, vector<2x4xf32>,
    %128 = math.log %124 : vector<2x1xf32>
    %129 = vector.broadcast %128 : vector<2x1xf32> to vector<2x4xf32>
    %130 = arith.subf %121, %129 : vector<2x4xf32>
    %c0_67 = arith.constant 0 : index
    %c0_68 = arith.constant 0 : index
    %131 = vector.load %arg18[%c0_67, %c0_68] : memref<2x4xf32, #tpu.memory_space<vmem>>, vector<2x4xf32>
    tpu.vector_store %arg18[%c0_67, %c0_68], %130 {strides = array<i32>} : memref<2x4xf32, #tpu.memory_space<vmem>>, vector<2x4xf32>,
    return
  }
}

module attributes {stable_mosaic.version = 11 : i64} {
  func.func @_pool_layer_kernel(%arg0: memref<16x16xi8, #tpu.memory_space<vmem>>, %arg1: memref<16x128xbf16, #tpu.memory_space<vmem>>, %arg2: memref<16x1xf32, #tpu.memory_space<vmem>>, %arg3: memref<1x16xf32, #tpu.memory_space<vmem>>, %arg4: memref<16x1xf32, #tpu.memory_space<vmem>>, %arg5: memref<16x1xi32, #tpu.memory_space<vmem>>, %arg6: memref<1x16xi32, #tpu.memory_space<vmem>>, %arg7: memref<2x16xf32, #tpu.memory_space<vmem>>, %arg8: memref<128x128xf32, #tpu.memory_space<vmem>>, %arg9: memref<1x128xf32, #tpu.memory_space<vmem>>, %arg10: memref<128x1xf32, #tpu.memory_space<vmem>>, %arg11: memref<1x1xf32, #tpu.memory_space<vmem>>, %arg12: memref<2x128xf32, #tpu.memory_space<vmem>>, %arg13: memref<2x128xf32, #tpu.memory_space<vmem>>, %arg14: memref<16x128xbf16, #tpu.memory_space<vmem>>, %arg15: memref<16x1xf32, #tpu.memory_space<vmem>>, %arg16: memref<16x1xf32, #tpu.memory_space<vmem>>) attributes {dimension_semantics = [], scalar_prefetch = 0 : i64, scratch_operands = 0 : i64, tpu.core_type = #tpu.core_type<tc>} {
    %c0 = arith.constant 0 : index
    %c0_0 = arith.constant 0 : index
    %0 = vector.load %arg0[%c0, %c0_0] : memref<16x16xi8, #tpu.memory_space<vmem>>, vector<16x16xi8>
    %1 = arith.sitofp %0 : vector<16x16xi8> to vector<16x16xf32>
    %2 = arith.truncf %1 : vector<16x16xf32> to vector<16x16xbf16>
    %c0_1 = arith.constant 0 : index
    %c0_2 = arith.constant 0 : index
    %3 = vector.load %arg1[%c0_1, %c0_2] : memref<16x128xbf16, #tpu.memory_space<vmem>>, vector<16x128xbf16>
    %4 = arith.extf %3 : vector<16x128xbf16> to vector<16x128xf32>
    %c0_3 = arith.constant 0 : index
    %c0_4 = arith.constant 0 : index
    %5 = vector.load %arg2[%c0_3, %c0_4] : memref<16x1xf32, #tpu.memory_space<vmem>>, vector<16x1xf32>
    %c0_5 = arith.constant 0 : index
    %c0_6 = arith.constant 0 : index
    %6 = vector.load %arg3[%c0_5, %c0_6] : memref<1x16xf32, #tpu.memory_space<vmem>>, vector<1x16xf32>
    %c0_7 = arith.constant 0 : index
    %c0_8 = arith.constant 0 : index
    %7 = vector.load %arg4[%c0_7, %c0_8] : memref<16x1xf32, #tpu.memory_space<vmem>>, vector<16x1xf32>
    %c0_9 = arith.constant 0 : index
    %c0_10 = arith.constant 0 : index
    %8 = vector.load %arg5[%c0_9, %c0_10] : memref<16x1xi32, #tpu.memory_space<vmem>>, vector<16x1xi32>
    %c0_11 = arith.constant 0 : index
    %c0_12 = arith.constant 0 : index
    %9 = vector.load %arg6[%c0_11, %c0_12] : memref<1x16xi32, #tpu.memory_space<vmem>>, vector<1x16xi32>
    %c0_13 = arith.constant 0 : index
    %c0_14 = arith.constant 0 : index
    %10 = vector.load %arg7[%c0_13, %c0_14] : memref<2x16xf32, #tpu.memory_space<vmem>>, vector<2x16xf32>
    %cst = arith.constant 5.000000e-01 : f32
    %11 = vector.broadcast %cst : f32 to vector<16x1xf32>
    %12 = arith.cmpf ogt, %7, %11 : vector<16x1xf32>
    %13 = vector.broadcast %8 : vector<16x1xi32> to vector<16x16xi32>
    %14 = vector.broadcast %9 : vector<1x16xi32> to vector<16x16xi32>
    %15 = arith.cmpi eq, %13, %14 : vector<16x16xi32>
    %16 = tpu.iota {dimensions = array<i32: 0>} : vector<16x16xi32>
    %17 = tpu.iota {dimensions = array<i32: 1>} : vector<16x16xi32>
    %18 = vector.broadcast %6 : vector<1x16xf32> to vector<16x16xf32>
    %19 = vector.broadcast %5 : vector<16x1xf32> to vector<16x16xf32>
    %20 = arith.cmpf ogt, %18, %19 : vector<16x16xf32>
    %21 = vector.broadcast %6 : vector<1x16xf32> to vector<16x16xf32>
    %22 = vector.broadcast %5 : vector<16x1xf32> to vector<16x16xf32>
    %23 = arith.cmpf oeq, %21, %22 : vector<16x16xf32>
    %24 = arith.cmpi slt, %17, %16 : vector<16x16xi32>
    %25 = arith.andi %23, %24 : vector<16x16xi1>
    %26 = arith.ori %20, %25 : vector<16x16xi1>
    %27 = arith.truncf %7 : vector<16x1xf32> to vector<16x1xbf16>
    %28 = arith.andi %15, %26 : vector<16x16xi1>
    %cst_15 = arith.constant 1.000000e+00 : f32
    %cst_16 = arith.constant 0.000000e+00 : f32
    %29 = vector.broadcast %cst_15 : f32 to vector<16x16xf32>
    %30 = vector.broadcast %cst_16 : f32 to vector<16x16xf32>
    %31 = arith.select %28, %29, %30 : vector<16x16xi1>, vector<16x16xf32>
    %32 = arith.truncf %31 : vector<16x16xf32> to vector<16x16xbf16>
    %cst_17 = arith.constant dense<0.000000e+00> : vector<16x1xf32>
    %33 = tpu.matmul %32, %27, %cst_17 {dimension_numbers = #tpu.dot_dimension_numbers<[1], [0], [0], [1], [0, 0, 1, 1], [], []>} : vector<16x16xbf16>, vector<16x1xbf16>, vector<16x1xf32> -> vector<16x1xf32>
    %cst_18 = arith.constant 1.000000e+00 : f32
    %cst_19 = arith.constant 0.000000e+00 : f32
    %34 = vector.broadcast %cst_18 : f32 to vector<16x16xf32>
    %35 = vector.broadcast %cst_19 : f32 to vector<16x16xf32>
    %36 = arith.select %15, %34, %35 : vector<16x16xi1>, vector<16x16xf32>
    %37 = arith.truncf %36 : vector<16x16xf32> to vector<16x16xbf16>
    %cst_20 = arith.constant dense<0.000000e+00> : vector<16x1xf32>
    %38 = tpu.matmul %37, %27, %cst_20 {dimension_numbers = #tpu.dot_dimension_numbers<[1], [0], [0], [1], [0, 0, 1, 1], [], []>} : vector<16x16xbf16>, vector<16x1xbf16>, vector<16x1xf32> -> vector<16x1xf32>
    %cst_21 = arith.constant 5.000000e-01 : f32
    %39 = vector.broadcast %cst_21 : f32 to vector<16x1xf32>
    %40 = arith.mulf %39, %38 : vector<16x1xf32>
    %41 = math.ceil %40 : vector<16x1xf32>
    %42 = arith.cmpf olt, %33, %41 : vector<16x1xf32>
    %43 = arith.andi %12, %42 : vector<16x1xi1>
    %cst_22 = arith.constant 1.000000e+00 : f32
    %cst_23 = arith.constant 0.000000e+00 : f32
    %44 = vector.broadcast %cst_22 : f32 to vector<16x1xf32>
    %45 = vector.broadcast %cst_23 : f32 to vector<16x1xf32>
    %46 = arith.select %43, %44, %45 : vector<16x1xi1>, vector<16x1xf32>
    %47 = math.tanh %5 : vector<16x1xf32>
    %48 = vector.broadcast %47 : vector<16x1xf32> to vector<16x128xf32>
    %49 = arith.mulf %4, %48 : vector<16x128xf32>
    %50 = vector.broadcast %46 : vector<16x1xf32> to vector<16x128xf32>
    %51 = arith.mulf %49, %50 : vector<16x128xf32>
    %cst_24 = arith.constant dense<0.000000e+00> : vector<2x1xf32>
    %52 = tpu.matmul %10, %46, %cst_24 {dimension_numbers = #tpu.dot_dimension_numbers<[1], [0], [0], [1], [0, 0, 1, 1], [], []>} : vector<2x16xf32>, vector<16x1xf32>, vector<2x1xf32> -> vector<2x1xf32>
    %cst_25 = arith.constant 0.000000e+00 : f32
    %53 = vector.broadcast %cst_25 : f32 to vector<2x1xf32>
    %54 = arith.cmpf ogt, %52, %53 : vector<2x1xf32>
    %cst_26 = arith.constant 1.000000e+00 : f32
    %55 = vector.broadcast %cst_26 : f32 to vector<2x1xf32>
    %56 = arith.divf %55, %52 : vector<2x1xf32>
    %cst_27 = arith.constant 0.000000e+00 : f32
    %57 = vector.broadcast %cst_27 : f32 to vector<2x1xf32>
    %58 = arith.select %54, %56, %57 : vector<2x1xi1>, vector<2x1xf32>
    %cst_28 = arith.constant dense<0.000000e+00> : vector<2x128xf32>
    %59 = tpu.matmul %10, %51, %cst_28 {dimension_numbers = #tpu.dot_dimension_numbers<[1], [0], [0], [1], [0, 0, 1, 1], [], []>} : vector<2x16xf32>, vector<16x128xf32>, vector<2x128xf32> -> vector<2x128xf32>
    %60 = vector.broadcast %58 : vector<2x1xf32> to vector<2x128xf32>
    %61 = arith.mulf %59, %60 : vector<2x128xf32>
    %c0_i32 = arith.constant 0 : i32
    %62 = vector.broadcast %c0_i32 : i32 to vector<16x1xi32>
    %63 = arith.cmpi eq, %8, %62 : vector<16x1xi32>
    %cst_29 = arith.constant 5.000000e-01 : f32
    %64 = vector.broadcast %cst_29 : f32 to vector<16x1xf32>
    %65 = arith.cmpf ogt, %46, %64 : vector<16x1xf32>
    %66 = arith.andi %63, %65 : vector<16x1xi1>
    %cst_30 = arith.constant -1.000000e+30 : f32
    %67 = vector.shape_cast %66 : vector<16x1xi1> to vector<16x1xi1>
    %68 = vector.broadcast %67 : vector<16x1xi1> to vector<16x128xi1>
    %69 = vector.broadcast %cst_30 : f32 to vector<16x128xf32>
    %70 = arith.select %68, %51, %69 : vector<16x128xi1>, vector<16x128xf32>
    %cst_31 = arith.constant dense<0xFF800000> : vector<128xf32>
    %71 = vector.multi_reduction <maximumf>, %70, %cst_31 [0] : vector<16x128xf32> to vector<128xf32>
    %72 = vector.shape_cast %71 : vector<128xf32> to vector<1x128xf32>
    %c1_i32 = arith.constant 1 : i32
    %73 = vector.broadcast %c1_i32 : i32 to vector<16x1xi32>
    %74 = arith.cmpi eq, %8, %73 : vector<16x1xi32>
    %cst_32 = arith.constant 5.000000e-01 : f32
    %75 = vector.broadcast %cst_32 : f32 to vector<16x1xf32>
    %76 = arith.cmpf ogt, %46, %75 : vector<16x1xf32>
    %77 = arith.andi %74, %76 : vector<16x1xi1>
    %cst_33 = arith.constant -1.000000e+30 : f32
    %78 = vector.shape_cast %77 : vector<16x1xi1> to vector<16x1xi1>
    %79 = vector.broadcast %78 : vector<16x1xi1> to vector<16x128xi1>
    %80 = vector.broadcast %cst_33 : f32 to vector<16x128xf32>
    %81 = arith.select %79, %51, %80 : vector<16x128xi1>, vector<16x128xf32>
    %cst_34 = arith.constant dense<0xFF800000> : vector<128xf32>
    %82 = vector.multi_reduction <maximumf>, %81, %cst_34 [0] : vector<16x128xf32> to vector<128xf32>
    %83 = vector.shape_cast %82 : vector<128xf32> to vector<1x128xf32>
    %cst_35 = arith.constant 0.000000e+00 : f32
    %84 = vector.broadcast %cst_35 : f32 to vector<2x1xf32>
    %85 = arith.cmpf ogt, %52, %84 : vector<2x1xf32>
    %86 = tpu.concatenate %72, %83 in 0 : vector<1x128xf32>, vector<1x128xf32> -> vector<2x128xf32>
    %cst_36 = arith.constant 0.000000e+00 : f32
    %87 = vector.shape_cast %85 : vector<2x1xi1> to vector<2x1xi1>
    %88 = vector.broadcast %87 : vector<2x1xi1> to vector<2x128xi1>
    %89 = vector.broadcast %cst_36 : f32 to vector<2x128xf32>
    %90 = arith.select %88, %86, %89 : vector<2x128xi1>, vector<2x128xf32>
    %c0_37 = arith.constant 0 : index
    %c0_38 = arith.constant 0 : index
    %91 = vector.load %arg12[%c0_37, %c0_38] : memref<2x128xf32, #tpu.memory_space<vmem>>, vector<2x128xf32>
    tpu.vector_store %arg12[%c0_37, %c0_38], %90 {strides = array<i32>} : memref<2x128xf32, #tpu.memory_space<vmem>>, vector<2x128xf32>,
    %c0_39 = arith.constant 0 : index
    %c0_40 = arith.constant 0 : index
    %92 = vector.load %arg13[%c0_39, %c0_40] : memref<2x128xf32, #tpu.memory_space<vmem>>, vector<2x128xf32>
    tpu.vector_store %arg13[%c0_39, %c0_40], %61 {strides = array<i32>} : memref<2x128xf32, #tpu.memory_space<vmem>>, vector<2x128xf32>,
    %c0_41 = arith.constant 0 : index
    %c0_42 = arith.constant 0 : index
    %93 = vector.load %arg16[%c0_41, %c0_42] : memref<16x1xf32, #tpu.memory_space<vmem>>, vector<16x1xf32>
    tpu.vector_store %arg16[%c0_41, %c0_42], %46 {strides = array<i32>} : memref<16x1xf32, #tpu.memory_space<vmem>>, vector<16x1xf32>,
    %94 = arith.truncf %46 : vector<16x1xf32> to vector<16x1xbf16>
    %cst_43 = arith.constant dense<0.000000e+00> : vector<16x1xf32>
    %95 = tpu.matmul %2, %94, %cst_43 {dimension_numbers = #tpu.dot_dimension_numbers<[1], [0], [0], [1], [0, 0, 1, 1], [], []>} : vector<16x16xbf16>, vector<16x1xbf16>, vector<16x1xf32> -> vector<16x1xf32>
    %cst_44 = arith.constant 1.000000e+00 : f32
    %96 = vector.broadcast %cst_44 : f32 to vector<16x1xf32>
    %97 = arith.addf %95, %96 : vector<16x1xf32>
    %98 = arith.mulf %46, %97 : vector<16x1xf32>
    %cst_45 = arith.constant 0.000000e+00 : f32
    %99 = vector.broadcast %cst_45 : f32 to vector<16x1xf32>
    %100 = arith.cmpf ogt, %98, %99 : vector<16x1xf32>
    %101 = math.rsqrt %98 : vector<16x1xf32>
    %cst_46 = arith.constant 0.000000e+00 : f32
    %102 = vector.broadcast %cst_46 : f32 to vector<16x1xf32>
    %103 = arith.select %100, %101, %102 : vector<16x1xi1>, vector<16x1xf32>
    %c0_47 = arith.constant 0 : index
    %c0_48 = arith.constant 0 : index
    %104 = vector.load %arg8[%c0_47, %c0_48] : memref<128x128xf32, #tpu.memory_space<vmem>>, vector<128x128xf32>
    %c0_49 = arith.constant 0 : index
    %c0_50 = arith.constant 0 : index
    %105 = vector.load %arg9[%c0_49, %c0_50] : memref<1x128xf32, #tpu.memory_space<vmem>>, vector<1x128xf32>
    %c0_51 = arith.constant 0 : index
    %c0_52 = arith.constant 0 : index
    %106 = vector.load %arg10[%c0_51, %c0_52] : memref<128x1xf32, #tpu.memory_space<vmem>>, vector<128x1xf32>
    %c0_53 = arith.constant 0 : index
    %c0_54 = arith.constant 0 : index
    %107 = vector.load %arg11[%c0_53, %c0_54] : memref<1x1xf32, #tpu.memory_space<vmem>>, vector<1x1xf32>
    %cst_55 = arith.constant dense<0.000000e+00> : vector<16x128xf32>
    %108 = tpu.matmul %51, %104, %cst_55 {dimension_numbers = #tpu.dot_dimension_numbers<[1], [0], [0], [1], [0, 0, 1, 1], [], []>} : vector<16x128xf32>, vector<128x128xf32>, vector<16x128xf32> -> vector<16x128xf32>
    %109 = vector.broadcast %103 : vector<16x1xf32> to vector<16x128xf32>
    %110 = arith.mulf %109, %108 : vector<16x128xf32>
    %111 = arith.truncf %110 : vector<16x128xf32> to vector<16x128xbf16>
    %cst_56 = arith.constant dense<0.000000e+00> : vector<16x128xf32>
    %112 = tpu.matmul %2, %111, %cst_56 {dimension_numbers = #tpu.dot_dimension_numbers<[1], [0], [0], [1], [0, 0, 1, 1], [], []>} : vector<16x16xbf16>, vector<16x128xbf16>, vector<16x128xf32> -> vector<16x128xf32>
    %113 = arith.addf %112, %110 : vector<16x128xf32>
    %114 = vector.broadcast %103 : vector<16x1xf32> to vector<16x128xf32>
    %115 = arith.mulf %114, %113 : vector<16x128xf32>
    %116 = vector.broadcast %105 : vector<1x128xf32> to vector<16x128xf32>
    %117 = arith.addf %115, %116 : vector<16x128xf32>
    %cst_57 = arith.constant 0.000000e+00 : f32
    %118 = vector.broadcast %cst_57 : f32 to vector<16x128xf32>
    %119 = arith.maximumf %117, %118 : vector<16x128xf32>
    %cst_58 = arith.constant dense<0.000000e+00> : vector<16x1xf32>
    %120 = tpu.matmul %119, %106, %cst_58 {dimension_numbers = #tpu.dot_dimension_numbers<[1], [0], [0], [1], [0, 0, 1, 1], [], []>} : vector<16x128xf32>, vector<128x1xf32>, vector<16x1xf32> -> vector<16x1xf32>
    %121 = arith.mulf %103, %120 : vector<16x1xf32>
    %122 = arith.truncf %121 : vector<16x1xf32> to vector<16x1xbf16>
    %cst_59 = arith.constant dense<0.000000e+00> : vector<16x1xf32>
    %123 = tpu.matmul %2, %122, %cst_59 {dimension_numbers = #tpu.dot_dimension_numbers<[1], [0], [0], [1], [0, 0, 1, 1], [], []>} : vector<16x16xbf16>, vector<16x1xbf16>, vector<16x1xf32> -> vector<16x1xf32>
    %124 = arith.addf %123, %121 : vector<16x1xf32>
    %125 = arith.mulf %103, %124 : vector<16x1xf32>
    %126 = vector.broadcast %107 : vector<1x1xf32> to vector<16x1xf32>
    %127 = arith.addf %125, %126 : vector<16x1xf32>
    %128 = arith.truncf %119 : vector<16x128xf32> to vector<16x128xbf16>
    %c0_60 = arith.constant 0 : index
    %c0_61 = arith.constant 0 : index
    %129 = vector.load %arg14[%c0_60, %c0_61] : memref<16x128xbf16, #tpu.memory_space<vmem>>, vector<16x128xbf16>
    tpu.vector_store %arg14[%c0_60, %c0_61], %128 {strides = array<i32>} : memref<16x128xbf16, #tpu.memory_space<vmem>>, vector<16x128xbf16>,
    %c0_62 = arith.constant 0 : index
    %c0_63 = arith.constant 0 : index
    %130 = vector.load %arg15[%c0_62, %c0_63] : memref<16x1xf32, #tpu.memory_space<vmem>>, vector<16x1xf32>
    tpu.vector_store %arg15[%c0_62, %c0_63], %127 {strides = array<i32>} : memref<16x1xf32, #tpu.memory_space<vmem>>, vector<16x1xf32>,
    return
  }
}

</mosaic_0001>

<llo_original>
// kernel: net_forward.4
$region0: #{net_forward.4}
  #allocation0 [shape = 'u32[]', space=smem, size = 0x4, offset = 0x4, fixed_abs, tag = 'smem constant byte address 0x4 - core index']
  #allocation1 [shape = 'u32[144,128]{1,0:T(1,128)}', space=vmem, size = 0x12000, scoped, tag = 'internal scratch']
  #allocation2 [shape = 'f32[1,1]{1,0:T(1,128)S(1)}', space=vmem, size = 0x200, scoped, tag = 'scoped memory for net_forward.4']
  %s0 = inlined_call_operand.vmem [shape: s8[16,16], index: 0, kind: input, shape index: {}]
  %s1 = inlined_call_operand.vmem [shape: f32[16,128], index: 1, kind: input, shape index: {}]
  %s2 = inlined_call_operand.vmem [shape: f32[128,128], index: 2, kind: input, shape index: {}]
  %s3 = inlined_call_operand.vmem [shape: f32[1,128], index: 3, kind: input, shape index: {}]
  %s4 = inlined_call_operand.vmem [shape: f32[128,1], index: 4, kind: input, shape index: {}]
  %s5 = inlined_call_operand.<no memory space> [shape: f32[1,1], index: 5, kind: input, shape index: {}]
  %s6 = inlined_call_operand.vmem [shape: bf16[16,128], index: 6, kind: output, shape index: {0}]
  %s7 = inlined_call_operand.vmem [shape: f32[16,1], index: 7, kind: output, shape index: {1}]
  %8 = xla_tuple %s6, %s7
  %s9 = sld [smem:[#allocation0]]
  $region42: #{net_forward.4} parent=0
    _
  %s11 = ssub.s32 1, %s9
  %s12 = scalar_select 0, %s11, %s9
  %v13 = vstv %s5
  %14 = vst [vmem:[#allocation2] sm:$0x1] %v13
  // Predicated region
  $region2: #{net_forward.4} parent=0 // pred_check
    _
  $region3: #{net_forward.4} parent=0 // pred_check_branch
    %16 = sbr.rel (0) target = $region5
  $region4: #{net_forward.4} parent=0 // pred_region
    _
  $region5: #{net_forward.4} parent=0 // pred_fallthru
    _
  // Predicated region
  $region6: #{net_forward.4} parent=0 // pred_check
    _
  $region7: #{net_forward.4} parent=0 // pred_check_branch
    %18 = sbr.rel (0) target = $region9
  $region8: #{net_forward.4} parent=0 // pred_region
    _
  $region9: #{net_forward.4} parent=0 // pred_fallthru
    _
  // Predicated region
  $region10: #{net_forward.4} parent=0 // pred_check
    _
  $region11: #{net_forward.4} parent=0 // pred_check_branch
    %20 = sbr.rel (0) target = $region13
  $region12: #{net_forward.4} parent=0 // pred_region
    _
  $region13: #{net_forward.4} parent=0 // pred_fallthru
    _
  // Predicated region
  $region14: #{net_forward.4} parent=0 // pred_check
    _
  $region15: #{net_forward.4} parent=0 // pred_check_branch
    %22 = sbr.rel (0) target = $region17
  $region16: #{net_forward.4} parent=0 // pred_region
    _
  $region17: #{net_forward.4} parent=0 // pred_fallthru
    _
  // Predicated region
  $region18: #{net_forward.4} parent=0 // pred_check
    _
  $region19: #{net_forward.4} parent=0 // pred_check_branch
    %24 = sbr.rel (0) target = $region21
  $region20: #{net_forward.4} parent=0 // pred_region
    _
  $region21: #{net_forward.4} parent=0 // pred_fallthru
    _
  // Predicated region
  $region22: #{net_forward.4} parent=0 // pred_check
    _
  $region23: #{net_forward.4} parent=0 // pred_check_branch
    %26 = sbr.rel (0) target = $region25
  $region24: #{net_forward.4} parent=0 // pred_region
    _
  $region25: #{net_forward.4} parent=0 // pred_fallthru
    _
  %v29 = vld [vmem:[%s0] sm:$0x3]
  %v30 = vld [vmem:[%s0 + $0x2] sm:$0x3]
  %v31 = vunpack.c.l.s8.bf16 %v29
  %v32 = vunpack.c.l.s8.bf16 %v30
  %v35 = vunpack.c.l.b16 %v31
  %v36 = vunpack.c.l.b16 %v32
  %v37 = vpack.c.b16 %v36, %v35
  %vm38 = vcmask 130048
  %v40 = vsel %vm38, %v37, 0
  %42 = vmatprep.subr.bf16.mxu0 0
  %43 = vmatpush1.bf16.msra.mxu0 1065369472
  %44 = vmatprep.subr.bf16.mxu0 0
  %45 = vmatpush1.bf16.msra.mxu0 0
  %46 = vmatprep.subr.bf16.mxu0 0
  %47 = vmatpush1.bf16.msra.mxu0 0
  %48 = vmatprep.subr.bf16.mxu0 0
  %49 = vmatpush1.bf16.msra.mxu0 0
  %50 = vmatprep.subr.bf16.mxu0 0
  %51 = vmatpush1.bf16.msra.mxu0 0
  %52 = vmatprep.subr.bf16.mxu0 0
  %53 = vmatpush1.bf16.msra.mxu0 0
  %54 = vmatprep.subr.bf16.mxu0 0
  %55 = vmatpush1.bf16.msra.mxu0 0
  %56 = vmatprep.subr.bf16.mxu0 0
  %57 = vmatpush1.bf16.msra.mxu0 0
  %58 = vmatprep.subr.bf16.mxu0 0
  %59 = vmatpush1.bf16.msra.mxu0 0
  %60 = vmatprep.subr.bf16.mxu0 0
  %61 = vmatpush1.bf16.msra.mxu0 0
  %62 = vmatprep.subr.bf16.mxu0 0
  %63 = vmatpush1.bf16.msra.mxu0 0
  %64 = vmatprep.subr.bf16.mxu0 0
  %65 = vmatpush1.bf16.msra.mxu0 0
  %66 = vmatprep.subr.bf16.mxu0 0
  %67 = vmatpush1.bf16.msra.mxu0 0
  %68 = vmatprep.subr.bf16.mxu0 0
  %69 = vmatpush1.bf16.msra.mxu0 0
  %70 = vmatprep.subr.bf16.mxu0 0
  %71 = vmatpush1.bf16.msra.mxu0 0
  %72 = vmatprep.subr.bf16.mxu0 0
  %73 = vmatpush1.bf16.msra.mxu0 0
  %74 = vmatprep.mubr.bf16.mxu0 0
  %75 = vmatmul.mubr.bf16.gmra.mrb[0].mxu0 %v40
  %v76 = vpop.f32.mrb[0].mxu0
  %v77 = vadd.f32 1.0, %v76
  %v78 = vpop.f32.mrb[0].mxu0
  %v79 = vpop.f32.mrb[0].mxu0
  %v80 = vadd.f32 1.0, %v79
  %v81 = vpop.f32.mrb[0].mxu0
  %82 = vdwg.mxu0
  %vm83 = vcmp.gt.f32.partialorder %v77, 0.0
  %vm84 = vcmp.gt.f32.partialorder %v80, 0.0
  %v85 = vrsqrt.pop %v77
  %v86 = vrsqrt.pop %v80
  %v87 = vsel %vm83, %v85, 0.0
  %v88 = vsel %vm84, %v86, 0.0
  %v89 = vld [vmem:[%s1] sm:$0xff]
  %v90 = vld [vmem:[%s1 + $0x8] sm:$0xff]
  %v91 = vld [vmem:[%s2] sm:$0xff]
  %v92 = vld [vmem:[%s2 + $0x8] sm:$0xff]
  %v93 = vld [vmem:[%s2 + $0x10] sm:$0xff]
  %v94 = vld [vmem:[%s2 + $0x18] sm:$0xff]
  %v95 = vld [vmem:[%s2 + $0x20] sm:$0xff]
  %v96 = vld [vmem:[%s2 + $0x28] sm:$0xff]
  %v97 = vld [vmem:[%s2 + $0x30] sm:$0xff]
  %v98 = vld [vmem:[%s2 + $0x38] sm:$0xff]
  %v99 = vld [vmem:[%s2 + $0x40] sm:$0xff]
  %v100 = vld [vmem:[%s2 + $0x48] sm:$0xff]
  %v101 = vld [vmem:[%s2 + $0x50] sm:$0xff]
  %v102 = vld [vmem:[%s2 + $0x58] sm:$0xff]
  %v103 = vld [vmem:[%s2 + $0x60] sm:$0xff]
  %v104 = vld [vmem:[%s2 + $0x68] sm:$0xff]
  %v105 = vld [vmem:[%s2 + $0x70] sm:$0xff]
  %v106 = vld [vmem:[%s2 + $0x78] sm:$0xff]
  %v107 = vld [vmem:[%s3] sm:$0x1]
  %v108 = vld [vmem:[%s4] sm:$0xff]
  %v109 = vld [vmem:[%s4 + $0x8] sm:$0xff]
  %v110 = vld [vmem:[%s4 + $0x10] sm:$0xff]
  %v111 = vld [vmem:[%s4 + $0x18] sm:$0xff]
  %v112 = vld [vmem:[%s4 + $0x20] sm:$0xff]
  %v113 = vld [vmem:[%s4 + $0x28] sm:$0xff]
  %v114 = vld [vmem:[%s4 + $0x30] sm:$0xff]
  %v115 = vld [vmem:[%s4 + $0x38] sm:$0xff]
  %v116 = vld [vmem:[%s4 + $0x40] sm:$0xff]
  %v117 = vld [vmem:[%s4 + $0x48] sm:$0xff]
  %v118 = vld [vmem:[%s4 + $0x50] sm:$0xff]
  %v119 = vld [vmem:[%s4 + $0x58] sm:$0xff]
  %v120 = vld [vmem:[%s4 + $0x60] sm:$0xff]
  %v121 = vld [vmem:[%s4 + $0x68] sm:$0xff]
  %v122 = vld [vmem:[%s4 + $0x70] sm:$0xff]
  %v123 = vld [vmem:[%s4 + $0x78] sm:$0xff]
  %v124 = vld [vmem:[#allocation2] sm:$0x1]
  %125 = vmatprep.subr.mxu0 0.0
  %126 = vmatpush1.msra.mxu0 %v91
  %127 = vmatprep.subr.mxu0 0.0
  %128 = vmatpush1.msra.mxu0 %v92
  %129 = vmatprep.subr.mxu0 0.0
  %130 = vmatpush1.msra.mxu0 %v93
  %131 = vmatprep.subr.mxu0 0.0
  %132 = vmatpush1.msra.mxu0 %v94
  %133 = vmatprep.subr.mxu0 0.0
  %134 = vmatpush1.msra.mxu0 %v95
  %135 = vmatprep.subr.mxu0 0.0
  %136 = vmatpush1.msra.mxu0 %v96
  %137 = vmatprep.subr.mxu0 0.0
  %138 = vmatpush1.msra.mxu0 %v97
  %139 = vmatprep.subr.mxu0 0.0
  %140 = vmatpush1.msra.mxu0 %v98
  %141 = vmatprep.subr.mxu0 0.0
  %142 = vmatpush1.msra.mxu0 %v99
  %143 = vmatprep.subr.mxu0 0.0
  %144 = vmatpush1.msra.mxu0 %v100
  %145 = vmatprep.subr.mxu0 0.0
  %146 = vmatpush1.msra.mxu0 %v101
  %147 = vmatprep.subr.mxu0 0.0
  %148 = vmatpush1.msra.mxu0 %v102
  %149 = vmatprep.subr.mxu0 0.0
  %150 = vmatpush1.msra.mxu0 %v103
  %151 = vmatprep.subr.mxu0 0.0
  %152 = vmatpush1.msra.mxu0 %v104
  %153 = vmatprep.subr.mxu0 0.0
  %154 = vmatpush1.msra.mxu0 %v105
  %155 = vmatprep.subr.mxu0 0.0
  %156 = vmatpush1.msra.mxu0 %v106
  %157 = vmatprep.subr.mxu0 0.0
  %158 = vmatpush1.msra.mxu0 0.0
  %159 = vmatprep.subr.mxu0 0.0
  %160 = vmatpush1.msra.mxu0 0.0
  %161 = vmatprep.subr.mxu0 0.0
  %162 = vmatpush1.msra.mxu0 0.0
  %163 = vmatprep.subr.mxu0 0.0
  %164 = vmatpush1.msra.mxu0 0.0
  %165 = vmatprep.subr.mxu0 0.0
  %166 = vmatpush1.msra.mxu0 0.0
  %167 = vmatprep.subr.mxu0 0.0
  %168 = vmatpush1.msra.mxu0 0.0
  %169 = vmatprep.subr.mxu0 0.0
  %170 = vmatpush1.msra.mxu0 0.0
  %171 = vmatprep.subr.mxu0 0.0
  %172 = vmatpush1.msra.mxu0 0.0
  %173 = vmatprep.subr.mxu0 0.0
  %174 = vmatpush1.msra.mxu0 0.0
  %175 = vmatprep.subr.mxu0 0.0
  %176 = vmatpush1.msra.mxu0 0.0
  %177 = vmatprep.subr.mxu0 0.0
  %178 = vmatpush1.msra.mxu0 0.0
  %179 = vmatprep.subr.mxu0 0.0
  %180 = vmatpush1.msra.mxu0 0.0
  %181 = vmatprep.subr.mxu0 0.0
  %182 = vmatpush1.msra.mxu0 0.0
  %183 = vmatprep.subr.mxu0 0.0
  %184 = vmatpush1.msra.mxu0 0.0
  %185 = vmatprep.subr.mxu0 0.0
  %186 = vmatpush1.msra.mxu0 0.0
  %187 = vmatprep.subr.mxu0 0.0
  %188 = vmatpush1.msra.mxu0 0.0
  %189 = vmatprep.mubr.f32.mxu0 0.0
  %190 = vmatmul.mubr.f32.gmra.mrb[0].mxu0 %v89
  %v191 = vpop.f32.mrb[0].mxu0
  %v192 = vadd.f32 0.0, %v191
  %v193 = vpop.f32.mrb[0].mxu0
  %194 = vmatprep.mubr.f32.mxu0 0.0
  %195 = vmatmul.mubr.f32.gmra.mrb[0].mxu0 %v90
  %v196 = vpop.f32.mrb[0].mxu0
  %v197 = vadd.f32 0.0, %v196
  %v198 = vpop.f32.mrb[0].mxu0
  %199 = vdwg.mxu0
  %201 = vset.pattern.permute.xlu0 0
  %202 = vperm.xlu0 %201, %v87
  %v203 = vpop.permute.xlu0 %202
  %206 = vset.pattern.permute.xlu0 0
  %207 = vperm.xlu0 %206, %v88
  %v208 = vpop.permute.xlu0 %207
  %v210 = vmul.f32 %v203, %v192
  %v211 = vmul.f32 %v208, %v197
  %v212 = vpack.c.bf16 %v211, %v210
  %213 = vmatprep.subr.bf16.mxu0 0
  %214 = vmatpush1.bf16.msra.mxu0 %v212
  %215 = vmatprep.subr.bf16.mxu0 0
  %216 = vmatpush1.bf16.msra.mxu0 0
  %217 = vmatprep.subr.bf16.mxu0 0
  %218 = vmatpush1.bf16.msra.mxu0 0
  %219 = vmatprep.subr.bf16.mxu0 0
  %220 = vmatpush1.bf16.msra.mxu0 0
  %221 = vmatprep.subr.bf16.mxu0 0
  %222 = vmatpush1.bf16.msra.mxu0 0
  %223 = vmatprep.subr.bf16.mxu0 0
  %224 = vmatpush1.bf16.msra.mxu0 0
  %225 = vmatprep.subr.bf16.mxu0 0
  %226 = vmatpush1.bf16.msra.mxu0 0
  %227 = vmatprep.subr.bf16.mxu0 0
  %228 = vmatpush1.bf16.msra.mxu0 0
  %229 = vmatprep.subr.bf16.mxu0 0
  %230 = vmatpush1.bf16.msra.mxu0 0
  %231 = vmatprep.subr.bf16.mxu0 0
  %232 = vmatpush1.bf16.msra.mxu0 0
  %233 = vmatprep.subr.bf16.mxu0 0
  %234 = vmatpush1.bf16.msra.mxu0 0
  %235 = vmatprep.subr.bf16.mxu0 0
  %236 = vmatpush1.bf16.msra.mxu0 0
  %237 = vmatprep.subr.bf16.mxu0 0
  %238 = vmatpush1.bf16.msra.mxu0 0
  %239 = vmatprep.subr.bf16.mxu0 0
  %240 = vmatpush1.bf16.msra.mxu0 0
  %241 = vmatprep.subr.bf16.mxu0 0
  %242 = vmatpush1.bf16.msra.mxu0 0
  %243 = vmatprep.subr.bf16.mxu0 0
  %244 = vmatpush1.bf16.msra.mxu0 0
  %245 = vmatprep.mubr.bf16.mxu0 0
  %246 = vmatmul.mubr.bf16.gmra.mrb[0].mxu0 %v40
  %v247 = vpop.f32.mrb[0].mxu0
  %v248 = vadd.f32 %v210, %v247
  %v249 = vpop.f32.mrb[0].mxu0
  %v250 = vpop.f32.mrb[0].mxu0
  %v251 = vadd.f32 %v211, %v250
  %v252 = vpop.f32.mrb[0].mxu0
  %253 = vdwg.mxu0
  %v254 = vmul.f32 %v203, %v248
  %v255 = vmul.f32 %v208, %v251
  %v257 = vlaneseq
  %v258 = vshrl.u32 %v257, 7
  %v259 = vsub.s32 0, %v258
  %v260 = vrot.slane %v107, %v259
  %v262 = vadd.f32 %v254, %v260
  %v263 = vadd.f32 %v255, %v260
  %v264 = vmax.f32 %v262, 0.0
  %v265 = vmax.f32 %v263, 0.0
  %266 = vmatprep.subr.mxu0 0.0
  %267 = vmatpush1.msra.mxu0 %v108
  %268 = vmatprep.subr.mxu0 0.0
  %269 = vmatpush1.msra.mxu0 %v109
  %270 = vmatprep.subr.mxu0 0.0
  %271 = vmatpush1.msra.mxu0 %v110
  %272 = vmatprep.subr.mxu0 0.0
  %273 = vmatpush1.msra.mxu0 %v111
  %274 = vmatprep.subr.mxu0 0.0
  %275 = vmatpush1.msra.mxu0 %v112
  %276 = vmatprep.subr.mxu0 0.0
  %277 = vmatpush1.msra.mxu0 %v113
  %278 = vmatprep.subr.mxu0 0.0
  %279 = vmatpush1.msra.mxu0 %v114
  %280 = vmatprep.subr.mxu0 0.0
  %281 = vmatpush1.msra.mxu0 %v115
  %282 = vmatprep.subr.mxu0 0.0
  %283 = vmatpush1.msra.mxu0 %v116
  %284 = vmatprep.subr.mxu0 0.0
  %285 = vmatpush1.msra.mxu0 %v117
  %286 = vmatprep.subr.mxu0 0.0
  %287 = vmatpush1.msra.mxu0 %v118
  %288 = vmatprep.subr.mxu0 0.0
  %289 = vmatpush1.msra.mxu0 %v119
  %290 = vmatprep.subr.mxu0 0.0
  %291 = vmatpush1.msra.mxu0 %v120
  %292 = vmatprep.subr.mxu0 0.0
  %293 = vmatpush1.msra.mxu0 %v121
  %294 = vmatprep.subr.mxu0 0.0
  %295 = vmatpush1.msra.mxu0 %v122
  %296 = vmatprep.subr.mxu0 0.0
  %297 = vmatpush1.msra.mxu0 %v123
  %298 = vmatprep.subr.mxu0 0.0
  %299 = vmatpush1.msra.mxu0 0.0
  %300 = vmatprep.subr.mxu0 0.0
  %301 = vmatpush1.msra.mxu0 0.0
  %302 = vmatprep.subr.mxu0 0.0
  %303 = vmatpush1.msra.mxu0 0.0
  %304 = vmatprep.subr.mxu0 0.0
  %305 = vmatpush1.msra.mxu0 0.0
  %306 = vmatprep.subr.mxu0 0.0
  %307 = vmatpush1.msra.mxu0 0.0
  %308 = vmatprep.subr.mxu0 0.0
  %309 = vmatpush1.msra.mxu0 0.0
  %310 = vmatprep.subr.mxu0 0.0
  %311 = vmatpush1.msra.mxu0 0.0
  %312 = vmatprep.subr.mxu0 0.0
  %313 = vmatpush1.msra.mxu0 0.0
  %314 = vmatprep.subr.mxu0 0.0
  %315 = vmatpush1.msra.mxu0 0.0
  %316 = vmatprep.subr.mxu0 0.0
  %317 = vmatpush1.msra.mxu0 0.0
  %318 = vmatprep.subr.mxu0 0.0
  %319 = vmatpush1.msra.mxu0 0.0
  %320 = vmatprep.subr.mxu0 0.0
  %321 = vmatpush1.msra.mxu0 0.0
  %322 = vmatprep.subr.mxu0 0.0
  %323 = vmatpush1.msra.mxu0 0.0
  %324 = vmatprep.subr.mxu0 0.0
  %325 = vmatpush1.msra.mxu0 0.0
  %326 = vmatprep.subr.mxu0 0.0
  %327 = vmatpush1.msra.mxu0 0.0
  %328 = vmatprep.subr.mxu0 0.0
  %329 = vmatpush1.msra.mxu0 0.0
  %330 = vmatprep.mubr.f32.mxu0 0.0
  %331 = vmatmul.mubr.f32.gmra.mrb[0].mxu0 %v264
  %v332 = vpop.f32.mrb[0].mxu0
  %v333 = vadd.f32 0.0, %v332
  %v334 = vpop.f32.mrb[0].mxu0
  %335 = vmatprep.mubr.f32.mxu0 0.0
  %336 = vmatmul.mubr.f32.gmra.mrb[0].mxu0 %v265
  %v337 = vpop.f32.mrb[0].mxu0
  %v338 = vadd.f32 0.0, %v337
  %v339 = vpop.f32.mrb[0].mxu0
  %340 = vdwg.mxu0
  %v341 = vmul.f32 %v87, %v333
  %v342 = vmul.f32 %v88, %v338
  %v343 = vpack.c.bf16 %v342, %v341
  %344 = vmatprep.subr.bf16.mxu0 0
  %345 = vmatpush1.bf16.msra.mxu0 %v343
  %346 = vmatprep.subr.bf16.mxu0 0
  %347 = vmatpush1.bf16.msra.mxu0 0
  %348 = vmatprep.subr.bf16.mxu0 0
  %349 = vmatpush1.bf16.msra.mxu0 0
  %350 = vmatprep.subr.bf16.mxu0 0
  %351 = vmatpush1.bf16.msra.mxu0 0
  %352 = vmatprep.subr.bf16.mxu0 0
  %353 = vmatpush1.bf16.msra.mxu0 0
  %354 = vmatprep.subr.bf16.mxu0 0
  %355 = vmatpush1.bf16.msra.mxu0 0
  %356 = vmatprep.subr.bf16.mxu0 0
  %357 = vmatpush1.bf16.msra.mxu0 0
  %358 = vmatprep.subr.bf16.mxu0 0
  %359 = vmatpush1.bf16.msra.mxu0 0
  %360 = vmatprep.subr.bf16.mxu0 0
  %361 = vmatpush1.bf16.msra.mxu0 0
  %362 = vmatprep.subr.bf16.mxu0 0
  %363 = vmatpush1.bf16.msra.mxu0 0
  %364 = vmatprep.subr.bf16.mxu0 0
  %365 = vmatpush1.bf16.msra.mxu0 0
  %366 = vmatprep.subr.bf16.mxu0 0
  %367 = vmatpush1.bf16.msra.mxu0 0
  %368 = vmatprep.subr.bf16.mxu0 0
  %369 = vmatpush1.bf16.msra.mxu0 0
  %370 = vmatprep.subr.bf16.mxu0 0
  %371 = vmatpush1.bf16.msra.mxu0 0
  %372 = vmatprep.subr.bf16.mxu0 0
  %373 = vmatpush1.bf16.msra.mxu0 0
  %374 = vmatprep.subr.bf16.mxu0 0
  %375 = vmatpush1.bf16.msra.mxu0 0
  %376 = vmatprep.mubr.bf16.mxu0 0
  %377 = vmatmul.mubr.bf16.gmra.mrb[0].mxu0 %v40
  %v378 = vpop.f32.mrb[0].mxu0
  %v379 = vadd.f32 %v341, %v378
  %v380 = vpop.f32.mrb[0].mxu0
  %v381 = vpop.f32.mrb[0].mxu0
  %v382 = vadd.f32 %v342, %v381
  %v383 = vpop.f32.mrb[0].mxu0
  %384 = vdwg.mxu0
  %v385 = vmul.f32 %v87, %v379
  %v386 = vmul.f32 %v88, %v382
  %v388 = vlaneseq
  %v389 = vshrl.u32 %v388, 7
  %v390 = vsub.s32 0, %v389
  %v391 = vrot.slane %v124, %v390
  %v393 = vadd.f32 %v385, %v391
  %v394 = vadd.f32 %v386, %v391
  %v395 = vpack.c.bf16 %v265, %v264
  %v397 = vunpack.c.l.b16 %v395
  %v398 = vunpack.c.h.b16 %v395
  %v399 = vpack.c.b16 %v397, %v397
  %v400 = vpack.c.b16 %v398, %v398
  %403 = vst [vmem:[%s6] sm:$0xf] %v399
  %404 = vst [vmem:[%s6 + $0x4] sm:$0xf] %v400
  %vm405 = vcmask 7168
  %406 = vst.msk [vmem:[%s7] sm:$0xff] %vm405, %v393
  %407 = vst.msk [vmem:[%s7 + $0x8] sm:$0xff] %vm405, %v394
  // Predicated region
  $region26: #{net_forward.4} parent=0 // pred_check
    _
  $region27: #{net_forward.4} parent=0 // pred_check_branch
    %409 = sbr.rel (0) target = $region29
  $region28: #{net_forward.4} parent=0 // pred_region
    _
  $region29: #{net_forward.4} parent=0 // pred_fallthru
    _
  // Predicated region
  $region30: #{net_forward.4} parent=0 // pred_check
    _
  $region31: #{net_forward.4} parent=0 // pred_check_branch
    %411 = sbr.rel (0) target = $region33
  $region32: #{net_forward.4} parent=0 // pred_region
    _
  $region33: #{net_forward.4} parent=0 // pred_fallthru
    _
  // Predicated region
  $region34: #{net_forward.4} parent=0 // pred_check
    _
  $region35: #{net_forward.4} parent=0 // pred_check_branch
    %413 = sbr.rel (0) target = $region37
  $region36: #{net_forward.4} parent=0 // pred_region
    _
  $region37: #{net_forward.4} parent=0 // pred_fallthru
    _
  // Predicated region
  $region38: #{net_forward.4} parent=0 // pred_check
    _
  $region39: #{net_forward.4} parent=0 // pred_check_branch
    %415 = sbr.rel (0) target = $region41
  $region40: #{net_forward.4} parent=0 // pred_region
    _
  $region41: #{net_forward.4} parent=0 // pred_fallthru
    _

// kernel: net_forward.7
$region0: #{net_forward.7}
  #allocation0 [shape = 'u32[]', space=smem, size = 0x4, offset = 0x4, fixed_abs, tag = 'smem constant byte address 0x4 - core index']
  #allocation1 [shape = 'u32[144,128]{1,0:T(1,128)}', space=vmem, size = 0x12000, scoped, tag = 'internal scratch']
  %s0 = inlined_call_operand.vmem [shape: bf16[16,128], index: 0, kind: input, shape index: {}]
  %s1 = inlined_call_operand.vmem [shape: f32[16,1], index: 1, kind: input, shape index: {}]
  %s2 = inlined_call_operand.vmem [shape: f32[1,16], index: 2, kind: input, shape index: {}]
  %s3 = inlined_call_operand.vmem [shape: f32[16,1], index: 3, kind: input, shape index: {}]
  %s4 = inlined_call_operand.vmem [shape: s32[16,1], index: 4, kind: input, shape index: {}]
  %s5 = inlined_call_operand.vmem [shape: s32[1,16], index: 5, kind: input, shape index: {}]
  %s6 = inlined_call_operand.vmem [shape: f32[2,16], index: 6, kind: input, shape index: {}]
  %s7 = inlined_call_operand.vmem [shape: f32[2,128], index: 7, kind: input, shape index: {}]
  %s8 = inlined_call_operand.vmem [shape: f32[2,128], index: 8, kind: input, shape index: {}]
  %s9 = inlined_call_operand.vmem [shape: f32[2,128], index: 9, kind: input, shape index: {}]
  %s10 = inlined_call_operand.vmem [shape: f32[2,128], index: 10, kind: input, shape index: {}]
  %s11 = inlined_call_operand.vmem [shape: f32[128,32], index: 11, kind: input, shape index: {}]
  %s12 = inlined_call_operand.vmem [shape: f32[128,32], index: 12, kind: input, shape index: {}]
  %s13 = inlined_call_operand.vmem [shape: f32[1,32], index: 13, kind: input, shape index: {}]
  %s14 = inlined_call_operand.vmem [shape: f32[32,16], index: 14, kind: input, shape index: {}]
  %s15 = inlined_call_operand.vmem [shape: f32[1,16], index: 15, kind: input, shape index: {}]
  %s16 = inlined_call_operand.vmem [shape: f32[16,4], index: 16, kind: input, shape index: {}]
  %s17 = inlined_call_operand.vmem [shape: f32[1,4], index: 17, kind: input, shape index: {}]
  %s18 = inlined_call_operand.hbm [shape: f32[2,4], index: 18, kind: output, shape index: {0}]
  %s19 = inlined_call_operand.hbm [shape: f32[2,4], index: 19, kind: output, shape index: {1}]
  %20 = xla_tuple %s18, %s19
  %s21 = sld [smem:[#allocation0]]
  $region90: #{net_forward.7} parent=0
    _
  %s23 = ssub.s32 1, %s21
  %s24 = scalar_select 0, %s23, %s21
  $region1: #{net_forward.7} parent=0
    #allocation2 [shape = 'u8[1024]{0}', space=vmem, size = 0x400, scoped, tag = 'output window, operand 0, single buffered']
    #allocation3 [shape = 's32[1]{0}', space=sflag, size = 0x4, scoped, tag = 'scoped memory for net_forward.7']
    #allocation4 [shape = 'u8[1024]{0}', space=vmem, size = 0x400, scoped, tag = 'output window, operand 1, single buffered']
    #allocation5 [shape = 's32[1]{0}', space=sflag, size = 0x4, scoped, tag = 'scoped memory for net_forward.7']
    %25 = vsyncpa [#allocation3], 0
    %26 = vsyncpa [#allocation5], 0
    // Predicated region
    $region2: #{net_forward.7} parent=1 // pred_check
      _
    $region3: #{net_forward.7} parent=1 // pred_check_branch
      %28 = sbr.rel (0) target = $region5
    $region4: #{net_forward.7} parent=1 // pred_region
      _
    $region5: #{net_forward.7} parent=1 // pred_fallthru
      _
    // Predicated region
    $region6: #{net_forward.7} parent=1 // pred_check
      _
    $region7: #{net_forward.7} parent=1 // pred_check_branch
      %30 = sbr.rel (0) target = $region9
    $region8: #{net_forward.7} parent=1 // pred_region
      _
    $region9: #{net_forward.7} parent=1 // pred_fallthru
      _
    // Predicated region
    $region10: #{net_forward.7} parent=1 // pred_check
      _
    $region11: #{net_forward.7} parent=1 // pred_check_branch
      %32 = sbr.rel (0) target = $region13
    $region12: #{net_forward.7} parent=1 // pred_region
      _
    $region13: #{net_forward.7} parent=1 // pred_fallthru
      _
    // Predicated region
    $region14: #{net_forward.7} parent=1 // pred_check
      _
    $region15: #{net_forward.7} parent=1 // pred_check_branch
      %34 = sbr.rel (0) target = $region17
    $region16: #{net_forward.7} parent=1 // pred_region
      _
    $region17: #{net_forward.7} parent=1 // pred_fallthru
      _
    // Predicated region
    $region18: #{net_forward.7} parent=1 // pred_check
      _
    $region19: #{net_forward.7} parent=1 // pred_check_branch
      %36 = sbr.rel (0) target = $region21
    $region20: #{net_forward.7} parent=1 // pred_region
      _
    $region21: #{net_forward.7} parent=1 // pred_fallthru
      _
    // Predicated region
    $region22: #{net_forward.7} parent=1 // pred_check
      _
    $region23: #{net_forward.7} parent=1 // pred_check_branch
      %38 = sbr.rel (0) target = $region25
    $region24: #{net_forward.7} parent=1 // pred_region
      _
    $region25: #{net_forward.7} parent=1 // pred_fallthru
      _
    // Predicated region
    $region26: #{net_forward.7} parent=1 // pred_check
      _
    $region27: #{net_forward.7} parent=1 // pred_check_branch
      %40 = sbr.rel (0) target = $region29
    $region28: #{net_forward.7} parent=1 // pred_region
      _
    $region29: #{net_forward.7} parent=1 // pred_fallthru
      _
    // Predicated region
    $region30: #{net_forward.7} parent=1 // pred_check
      _
    $region31: #{net_forward.7} parent=1 // pred_check_branch
      %42 = sbr.rel (0) target = $region33
    $region32: #{net_forward.7} parent=1 // pred_region
      _
    $region33: #{net_forward.7} parent=1 // pred_fallthru
      _
    // Predicated region
    $region34: #{net_forward.7} parent=1 // pred_check
      _
    $region35: #{net_forward.7} parent=1 // pred_check_branch
      %44 = sbr.rel (0) target = $region37
    $region36: #{net_forward.7} parent=1 // pred_region
      _
    $region37: #{net_forward.7} parent=1 // pred_fallthru
      _
    // Predicated region
    $region38: #{net_forward.7} parent=1 // pred_check
      _
    $region39: #{net_forward.7} parent=1 // pred_check_branch
      %46 = sbr.rel (0) target = $region41
    $region40: #{net_forward.7} parent=1 // pred_region
      _
    $region41: #{net_forward.7} parent=1 // pred_fallthru
      _
    // Predicated region
    $region42: #{net_forward.7} parent=1 // pred_check
      _
    $region43: #{net_forward.7} parent=1 // pred_check_branch
      %48 = sbr.rel (0) target = $region45
    $region44: #{net_forward.7} parent=1 // pred_region
      _
    $region45: #{net_forward.7} parent=1 // pred_fallthru
      _
    // Predicated region
    $region46: #{net_forward.7} parent=1 // pred_check
      _
    $region47: #{net_forward.7} parent=1 // pred_check_branch
      %50 = sbr.rel (0) target = $region49
    $region48: #{net_forward.7} parent=1 // pred_region
      _
    $region49: #{net_forward.7} parent=1 // pred_fallthru
      _
    // Predicated region
    $region50: #{net_forward.7} parent=1 // pred_check
      _
    $region51: #{net_forward.7} parent=1 // pred_check_branch
      %52 = sbr.rel (0) target = $region53
    $region52: #{net_forward.7} parent=1 // pred_region
      _
    $region53: #{net_forward.7} parent=1 // pred_fallthru
      _
    // Predicated region
    $region54: #{net_forward.7} parent=1 // pred_check
      _
    $region55: #{net_forward.7} parent=1 // pred_check_branch
      %54 = sbr.rel (0) target = $region57
    $region56: #{net_forward.7} parent=1 // pred_region
      _
    $region57: #{net_forward.7} parent=1 // pred_fallthru
      _
    // Predicated region
    $region58: #{net_forward.7} parent=1 // pred_check
      _
    $region59: #{net_forward.7} parent=1 // pred_check_branch
      %56 = sbr.rel (0) target = $region61
    $region60: #{net_forward.7} parent=1 // pred_region
      _
    $region61: #{net_forward.7} parent=1 // pred_fallthru
      _
    // Predicated region
    $region62: #{net_forward.7} parent=1 // pred_check
      _
    $region63: #{net_forward.7} parent=1 // pred_check_branch
      %58 = sbr.rel (0) target = $region65
    $region64: #{net_forward.7} parent=1 // pred_region
      _
    $region65: #{net_forward.7} parent=1 // pred_fallthru
      _
    // Predicated region
    $region66: #{net_forward.7} parent=1 // pred_check
      _
    $region67: #{net_forward.7} parent=1 // pred_check_branch
      %60 = sbr.rel (0) target = $region69
    $region68: #{net_forward.7} parent=1 // pred_region
      _
    $region69: #{net_forward.7} parent=1 // pred_fallthru
      _
    // Predicated region
    $region70: #{net_forward.7} parent=1 // pred_check
      _
    $region71: #{net_forward.7} parent=1 // pred_check_branch
      %62 = sbr.rel (0) target = $region73
    $region72: #{net_forward.7} parent=1 // pred_region
      _
    $region73: #{net_forward.7} parent=1 // pred_fallthru
      _
    %v64 = vld [vmem:[%s0] sm:$0xf]
    %v65 = vld [vmem:[%s0 + $0x4] sm:$0xf]
    %v66 = vunpack.c.l.bf16 %v64
    %v67 = vunpack.c.l.bf16 %v65
    %v68 = vld [vmem:[%s1] sm:$0xff]
    %v69 = vld [vmem:[%s1 + $0x8] sm:$0xff]
    %v70 = vld [vmem:[%s2] sm:$0x1]
    %v71 = vld [vmem:[%s3] sm:$0xff]
    %v72 = vld [vmem:[%s3 + $0x8] sm:$0xff]
    %v73 = vld [vmem:[%s4] sm:$0xff]
    %v74 = vld [vmem:[%s4 + $0x8] sm:$0xff]
    %v75 = vld [vmem:[%s5] sm:$0x1]
    %v76 = vld [vmem:[%s6] sm:$0x3]
    %vm77 = vcmp.gt.f32.partialorder %v71, 0.5
    %vm78 = vcmp.gt.f32.partialorder %v72, 0.5
    %79 = vset.pattern.permute.xlu0 0
    %80 = vperm.xlu0 %79, %v73
    %v81 = vpop.permute.xlu0 %80
    %82 = vset.pattern.permute.xlu0 0
    %83 = vperm.xlu0 %82, %v74
    %v84 = vpop.permute.xlu0 %83
    %v85 = vlaneseq
    %v86 = vshrl.u32 %v85, 7
    %v87 = vsub.s32 0, %v86
    %v88 = vrot.slane %v75, %v87
    %vm89 = vcmp.eq.s32.totalorder %v81, %v88
    %vm90 = vcmp.eq.s32.totalorder %v84, %v88
    %v91 = vlaneseq
    %v92 = vshrl.u32 %v91, 7
    %v93 = vadd.s32 %v92, 8
    %v94 = vlaneseq
    %v95 = vand.u32 %v94, 127
    %v97 = vlaneseq
    %v98 = vshrl.u32 %v97, 7
    %v99 = vsub.s32 0, %v98
    %v100 = vrot.slane %v70, %v99
    %103 = vset.pattern.permute.xlu0 0
    %104 = vperm.xlu0 %103, %v68
    %v105 = vpop.permute.xlu0 %104
    %108 = vset.pattern.permute.xlu0 0
    %109 = vperm.xlu0 %108, %v69
    %v110 = vpop.permute.xlu0 %109
    %vm112 = vcmp.gt.f32.partialorder %v100, %v105
    %vm113 = vcmp.gt.f32.partialorder %v100, %v110
    %vm114 = vcmp.eq.f32.partialorder %v100, %v105
    %vm115 = vcmp.eq.f32.partialorder %v100, %v110
    %vm116 = vcmp.lt.s32.totalorder %v95, %v92
    %vm117 = vcmp.lt.s32.totalorder %v95, %v93
    %vm118 = vmand %vm114, %vm116
    %vm119 = vmand %vm115, %vm117
    %vm120 = vmor %vm112, %vm118
    %vm121 = vmor %vm113, %vm119
    %v122 = vpack.c.bf16 %v72, %v71
    %vm123 = vmand %vm89, %vm120
    %vm124 = vmand %vm90, %vm121
    %v125 = vsel %vm123, 1.0, 0.0
    %v126 = vsel %vm124, 1.0, 0.0
    %v127 = vpack.c.bf16 %v126, %v125
    %vm128 = vcmask 130048
    %v130 = vsel %vm128, %v127, 0
    %132 = vmatprep.subr.bf16.mxu0 0
    %133 = vmatpush1.bf16.msra.mxu0 %v122
    %134 = vmatprep.subr.bf16.mxu0 0
    %135 = vmatpush1.bf16.msra.mxu0 0
    %136 = vmatprep.subr.bf16.mxu0 0
    %137 = vmatpush1.bf16.msra.mxu0 0
    %138 = vmatprep.subr.bf16.mxu0 0
    %139 = vmatpush1.bf16.msra.mxu0 0
    %140 = vmatprep.subr.bf16.mxu0 0
    %141 = vmatpush1.bf16.msra.mxu0 0
    %142 = vmatprep.subr.bf16.mxu0 0
    %143 = vmatpush1.bf16.msra.mxu0 0
    %144 = vmatprep.subr.bf16.mxu0 0
    %145 = vmatpush1.bf16.msra.mxu0 0
    %146 = vmatprep.subr.bf16.mxu0 0
    %147 = vmatpush1.bf16.msra.mxu0 0
    %148 = vmatprep.subr.bf16.mxu0 0
    %149 = vmatpush1.bf16.msra.mxu0 0
    %150 = vmatprep.subr.bf16.mxu0 0
    %151 = vmatpush1.bf16.msra.mxu0 0
    %152 = vmatprep.subr.bf16.mxu0 0
    %153 = vmatpush1.bf16.msra.mxu0 0
    %154 = vmatprep.subr.bf16.mxu0 0
    %155 = vmatpush1.bf16.msra.mxu0 0
    %156 = vmatprep.subr.bf16.mxu0 0
    %157 = vmatpush1.bf16.msra.mxu0 0
    %158 = vmatprep.subr.bf16.mxu0 0
    %159 = vmatpush1.bf16.msra.mxu0 0
    %160 = vmatprep.subr.bf16.mxu0 0
    %161 = vmatpush1.bf16.msra.mxu0 0
    %162 = vmatprep.subr.bf16.mxu0 0
    %163 = vmatpush1.bf16.msra.mxu0 0
    %164 = vmatprep.mubr.bf16.mxu0 0
    %165 = vmatmul.mubr.bf16.gmra.mrb[0].mxu0 %v130
    %v166 = vpop.f32.mrb[0].mxu0
    %v167 = vadd.f32 0.0, %v166
    %v168 = vpop.f32.mrb[0].mxu0
    %v169 = vpop.f32.mrb[0].mxu0
    %v170 = vadd.f32 0.0, %v169
    %v171 = vpop.f32.mrb[0].mxu0
    %172 = vdwg.mxu0
    %v173 = vsel %vm89, 1.0, 0.0
    %v174 = vsel %vm90, 1.0, 0.0
    %v175 = vpack.c.bf16 %v174, %v173
    %v177 = vsel %vm128, %v175, 0
    %179 = vmatprep.subr.bf16.mxu0 0
    %180 = vmatpush1.bf16.msra.mxu0 %v122
    %181 = vmatprep.subr.bf16.mxu0 0
    %182 = vmatpush1.bf16.msra.mxu0 0
    %183 = vmatprep.subr.bf16.mxu0 0
    %184 = vmatpush1.bf16.msra.mxu0 0
    %185 = vmatprep.subr.bf16.mxu0 0
    %186 = vmatpush1.bf16.msra.mxu0 0
    %187 = vmatprep.subr.bf16.mxu0 0
    %188 = vmatpush1.bf16.msra.mxu0 0
    %189 = vmatprep.subr.bf16.mxu0 0
    %190 = vmatpush1.bf16.msra.mxu0 0
    %191 = vmatprep.subr.bf16.mxu0 0
    %192 = vmatpush1.bf16.msra.mxu0 0
    %193 = vmatprep.subr.bf16.mxu0 0
    %194 = vmatpush1.bf16.msra.mxu0 0
    %195 = vmatprep.subr.bf16.mxu0 0
    %196 = vmatpush1.bf16.msra.mxu0 0
    %197 = vmatprep.subr.bf16.mxu0 0
    %198 = vmatpush1.bf16.msra.mxu0 0
    %199 = vmatprep.subr.bf16.mxu0 0
    %200 = vmatpush1.bf16.msra.mxu0 0
    %201 = vmatprep.subr.bf16.mxu0 0
    %202 = vmatpush1.bf16.msra.mxu0 0
    %203 = vmatprep.subr.bf16.mxu0 0
    %204 = vmatpush1.bf16.msra.mxu0 0
    %205 = vmatprep.subr.bf16.mxu0 0
    %206 = vmatpush1.bf16.msra.mxu0 0
    %207 = vmatprep.subr.bf16.mxu0 0
    %208 = vmatpush1.bf16.msra.mxu0 0
    %209 = vmatprep.subr.bf16.mxu0 0
    %210 = vmatpush1.bf16.msra.mxu0 0
    %211 = vmatprep.mubr.bf16.mxu0 0
    %212 = vmatmul.mubr.bf16.gmra.mrb[0].mxu0 %v177
    %v213 = vpop.f32.mrb[0].mxu0
    %v214 = vadd.f32 0.0, %v213
    %v215 = vpop.f32.mrb[0].mxu0
    %v216 = vpop.f32.mrb[0].mxu0
    %v217 = vadd.f32 0.0, %v216
    %v218 = vpop.f32.mrb[0].mxu0
    %219 = vdwg.mxu0
    %v220 = vmul.f32 %v214, 0.5
    %v221 = vmul.f32 %v217, 0.5
    %v222 = vceil.f32 %v220
    %v223 = vceil.f32 %v221
    %vm224 = vcmp.lt.f32.partialorder %v167, %v222
    %vm225 = vcmp.lt.f32.partialorder %v170, %v223
    %vm226 = vmand %vm77, %vm224
    %vm227 = vmand %vm78, %vm225
    %v228 = vsel %vm226, 1.0, 0.0
    %v229 = vsel %vm227, 1.0, 0.0
    %v230 = vtanh.pop %v68
    %v231 = vtanh.pop %v69
    %233 = vset.pattern.permute.xlu0 0
    %234 = vperm.xlu0 %233, %v230
    %v235 = vpop.permute.xlu0 %234
    %238 = vset.pattern.permute.xlu0 0
    %239 = vperm.xlu0 %238, %v231
    %v240 = vpop.permute.xlu0 %239
    %v242 = vmul.f32 %v66, %v235
    %v243 = vmul.f32 %v67, %v240
    %245 = vset.pattern.permute.xlu0 0
    %246 = vperm.xlu0 %245, %v228
    %v247 = vpop.permute.xlu0 %246
    %250 = vset.pattern.permute.xlu0 0
    %251 = vperm.xlu0 %250, %v229
    %v252 = vpop.permute.xlu0 %251
    %v254 = vmul.f32 %v242, %v247
    %v255 = vmul.f32 %v243, %v252
    %v257 = vsel %vm128, %v76, 0
    %259 = vmatprep.subr.mxu0 0.0
    %260 = vmatpush1.msra.mxu0 %v228
    %261 = vmatprep.subr.mxu0 0.0
    %262 = vmatpush1.msra.mxu0 %v229
    %263 = vmatprep.subr.mxu0 0.0
    %264 = vmatpush1.msra.mxu0 0.0
    %265 = vmatprep.subr.mxu0 0.0
    %266 = vmatpush1.msra.mxu0 0.0
    %267 = vmatprep.subr.mxu0 0.0
    %268 = vmatpush1.msra.mxu0 0.0
    %269 = vmatprep.subr.mxu0 0.0
    %270 = vmatpush1.msra.mxu0 0.0
    %271 = vmatprep.subr.mxu0 0.0
    %272 = vmatpush1.msra.mxu0 0.0
    %273 = vmatprep.subr.mxu0 0.0
    %274 = vmatpush1.msra.mxu0 0.0
    %275 = vmatprep.subr.mxu0 0.0
    %276 = vmatpush1.msra.mxu0 0.0
    %277 = vmatprep.subr.mxu0 0.0
    %278 = vmatpush1.msra.mxu0 0.0
    %279 = vmatprep.subr.mxu0 0.0
    %280 = vmatpush1.msra.mxu0 0.0
    %281 = vmatprep.subr.mxu0 0.0
    %282 = vmatpush1.msra.mxu0 0.0
    %283 = vmatprep.subr.mxu0 0.0
    %284 = vmatpush1.msra.mxu0 0.0
    %285 = vmatprep.subr.mxu0 0.0
    %286 = vmatpush1.msra.mxu0 0.0
    %287 = vmatprep.subr.mxu0 0.0
    %288 = vmatpush1.msra.mxu0 0.0
    %289 = vmatprep.subr.mxu0 0.0
    %290 = vmatpush1.msra.mxu0 0.0
    %291 = vmatprep.subr.mxu0 0.0
    %292 = vmatpush1.msra.mxu0 0.0
    %293 = vmatprep.subr.mxu0 0.0
    %294 = vmatpush1.msra.mxu0 0.0
    %295 = vmatprep.subr.mxu0 0.0
    %296 = vmatpush1.msra.mxu0 0.0
    %297 = vmatprep.subr.mxu0 0.0
    %298 = vmatpush1.msra.mxu0 0.0
    %299 = vmatprep.subr.mxu0 0.0
    %300 = vmatpush1.msra.mxu0 0.0
    %301 = vmatprep.subr.mxu0 0.0
    %302 = vmatpush1.msra.mxu0 0.0
    %303 = vmatprep.subr.mxu0 0.0
    %304 = vmatpush1.msra.mxu0 0.0
    %305 = vmatprep.subr.mxu0 0.0
    %306 = vmatpush1.msra.mxu0 0.0
    %307 = vmatprep.subr.mxu0 0.0
    %308 = vmatpush1.msra.mxu0 0.0
    %309 = vmatprep.subr.mxu0 0.0
    %310 = vmatpush1.msra.mxu0 0.0
    %311 = vmatprep.subr.mxu0 0.0
    %312 = vmatpush1.msra.mxu0 0.0
    %313 = vmatprep.subr.mxu0 0.0
    %314 = vmatpush1.msra.mxu0 0.0
    %315 = vmatprep.subr.mxu0 0.0
    %316 = vmatpush1.msra.mxu0 0.0
    %317 = vmatprep.subr.mxu0 0.0
    %318 = vmatpush1.msra.mxu0 0.0
    %319 = vmatprep.subr.mxu0 0.0
    %320 = vmatpush1.msra.mxu0 0.0
    %321 = vmatprep.subr.mxu0 0.0
    %322 = vmatpush1.msra.mxu0 0.0
    %323 = vmatprep.mubr.f32.mxu0 0.0
    %324 = vmatmul.mubr.f32.gmra.mrb[0].mxu0 %v257
    %v325 = vpop.f32.mrb[0].mxu0
    %v326 = vadd.f32 0.0, %v325
    %v327 = vpop.f32.mrb[0].mxu0
    %328 = vdwg.mxu0
    %vm329 = vcmp.gt.f32.partialorder %v326, 0.0
    %v330 = vrcp.pop %v326
    %v331 = vmul.f32 1.0, %v330
    %v332 = vsel %vm329, %v331, 0.0
    %333 = vmatprep.subr.mxu0 0.0
    %334 = vmatpush1.msra.mxu0 %v254
    %335 = vmatprep.subr.mxu0 0.0
    %336 = vmatpush1.msra.mxu0 %v255
    %337 = vmatprep.subr.mxu0 0.0
    %338 = vmatpush1.msra.mxu0 0.0
    %339 = vmatprep.subr.mxu0 0.0
    %340 = vmatpush1.msra.mxu0 0.0
    %341 = vmatprep.subr.mxu0 0.0
    %342 = vmatpush1.msra.mxu0 0.0
    %343 = vmatprep.subr.mxu0 0.0
    %344 = vmatpush1.msra.mxu0 0.0
    %345 = vmatprep.subr.mxu0 0.0
    %346 = vmatpush1.msra.mxu0 0.0
    %347 = vmatprep.subr.mxu0 0.0
    %348 = vmatpush1.msra.mxu0 0.0
    %349 = vmatprep.subr.mxu0 0.0
    %350 = vmatpush1.msra.mxu0 0.0
    %351 = vmatprep.subr.mxu0 0.0
    %352 = vmatpush1.msra.mxu0 0.0
    %353 = vmatprep.subr.mxu0 0.0
    %354 = vmatpush1.msra.mxu0 0.0
    %355 = vmatprep.subr.mxu0 0.0
    %356 = vmatpush1.msra.mxu0 0.0
    %357 = vmatprep.subr.mxu0 0.0
    %358 = vmatpush1.msra.mxu0 0.0
    %359 = vmatprep.subr.mxu0 0.0
    %360 = vmatpush1.msra.mxu0 0.0
    %361 = vmatprep.subr.mxu0 0.0
    %362 = vmatpush1.msra.mxu0 0.0
    %363 = vmatprep.subr.mxu0 0.0
    %364 = vmatpush1.msra.mxu0 0.0
    %365 = vmatprep.subr.mxu0 0.0
    %366 = vmatpush1.msra.mxu0 0.0
    %367 = vmatprep.subr.mxu0 0.0
    %368 = vmatpush1.msra.mxu0 0.0
    %369 = vmatprep.subr.mxu0 0.0
    %370 = vmatpush1.msra.mxu0 0.0
    %371 = vmatprep.subr.mxu0 0.0
    %372 = vmatpush1.msra.mxu0 0.0
    %373 = vmatprep.subr.mxu0 0.0
    %374 = vmatpush1.msra.mxu0 0.0
    %375 = vmatprep.subr.mxu0 0.0
    %376 = vmatpush1.msra.mxu0 0.0
    %377 = vmatprep.subr.mxu0 0.0
    %378 = vmatpush1.msra.mxu0 0.0
    %379 = vmatprep.subr.mxu0 0.0
    %380 = vmatpush1.msra.mxu0 0.0
    %381 = vmatprep.subr.mxu0 0.0
    %382 = vmatpush1.msra.mxu0 0.0
    %383 = vmatprep.subr.mxu0 0.0
    %384 = vmatpush1.msra.mxu0 0.0
    %385 = vmatprep.subr.mxu0 0.0
    %386 = vmatpush1.msra.mxu0 0.0
    %387 = vmatprep.subr.mxu0 0.0
    %388 = vmatpush1.msra.mxu0 0.0
    %389 = vmatprep.subr.mxu0 0.0
    %390 = vmatpush1.msra.mxu0 0.0
    %391 = vmatprep.subr.mxu0 0.0
    %392 = vmatpush1.msra.mxu0 0.0
    %393 = vmatprep.subr.mxu0 0.0
    %394 = vmatpush1.msra.mxu0 0.0
    %395 = vmatprep.subr.mxu0 0.0
    %396 = vmatpush1.msra.mxu0 0.0
    %397 = vmatprep.mubr.f32.mxu0 0.0
    %398 = vmatmul.mubr.f32.gmra.mrb[0].mxu0 %v257
    %v399 = vpop.f32.mrb[0].mxu0
    %v400 = vadd.f32 0.0, %v399
    %v401 = vpop.f32.mrb[0].mxu0
    %402 = vdwg.mxu0
    %404 = vset.pattern.permute.xlu0 0
    %405 = vperm.xlu0 %404, %v332
    %v406 = vpop.permute.xlu0 %405
    %v408 = vmul.f32 %v400, %v406
    %vm409 = vcmp.eq.s32.totalorder %v73, 0
    %vm410 = vcmp.eq.s32.totalorder %v74, 0
    %vm411 = vcmp.gt.f32.partialorder %v228, 0.5
    %vm412 = vcmp.gt.f32.partialorder %v229, 0.5
    %vm413 = vmand %vm409, %vm411
    %vm414 = vmand %vm410, %vm412
    %v415 = vsel %vm413, 1, 0
    %v416 = vsel %vm414, 1, 0
    %417 = vset.pattern.permute.xlu0 0
    %418 = vperm.xlu0 %417, %v415
    %v419 = vpop.permute.xlu0 %418
    %420 = vset.pattern.permute.xlu0 0
    %421 = vperm.xlu0 %420, %v416
    %v422 = vpop.permute.xlu0 %421
    %vm423 = vcmp.eq.s32.totalorder %v419, 1
    %vm424 = vcmp.eq.s32.totalorder %v422, 1
    %v425 = vsel %vm423, %v254, -1e+30
    %v426 = vsel %vm424, %v255, -1e+30
    %v427 = vmax.f32 %v425, %v426
    %v428 = vrot.slane %v427, 4
    %v429 = vmax.f32 %v427, %v428
    %v430 = vrot.slane %v429, 2
    %v431 = vmax.f32 %v429, %v430
    %v432 = vrot.slane %v431, 1
    %v433 = vmax.f32 %v431, %v432
    %vm434 = vcmp.eq.s32.totalorder %v73, 1
    %vm435 = vcmp.eq.s32.totalorder %v74, 1
    %vm436 = vmand %vm434, %vm411
    %vm437 = vmand %vm435, %vm412
    %v438 = vsel %vm436, 1, 0
    %v439 = vsel %vm437, 1, 0
    %440 = vset.pattern.permute.xlu0 0
    %441 = vperm.xlu0 %440, %v438
    %v442 = vpop.permute.xlu0 %441
    %443 = vset.pattern.permute.xlu0 0
    %444 = vperm.xlu0 %443, %v439
    %v445 = vpop.permute.xlu0 %444
    %vm446 = vcmp.eq.s32.totalorder %v442, 1
    %vm447 = vcmp.eq.s32.totalorder %v445, 1
    %v448 = vsel %vm446, %v254, -1e+30
    %v449 = vsel %vm447, %v255, -1e+30
    %v450 = vmax.f32 %v448, %v449
    %v451 = vrot.slane %v450, 4
    %v452 = vmax.f32 %v450, %v451
    %v453 = vrot.slane %v452, 2
    %v454 = vmax.f32 %v452, %v453
    %v455 = vrot.slane %v454, 1
    %v456 = vmax.f32 %v454, %v455
    %vm457 = vcmask 1040384
    %v458 = vsel %vm457, %v433, %v456
    %v459 = vsel %vm329, 1, 0
    %460 = vset.pattern.permute.xlu0 0
    %461 = vperm.xlu0 %460, %v459
    %v462 = vpop.permute.xlu0 %461
    %vm463 = vcmp.eq.s32.totalorder %v462, 1
    %v464 = vsel %vm463, %v458, 0.0
    %v465 = vld [vmem:[%s7] sm:$0x3]
    %v466 = vld [vmem:[%s9] sm:$0x3]
    %v467 = vadd.f32 %v465, %v466
    %v468 = vadd.f32 %v467, %v464
    %v469 = vld [vmem:[%s8] sm:$0x3]
    %v470 = vld [vmem:[%s10] sm:$0x3]
    %v471 = vadd.f32 %v469, %v470
    %v472 = vadd.f32 %v471, %v408
    %v473 = vld [vmem:[%s11] sm:$0xff]
    %v474 = vld [vmem:[%s11 + $0x8] sm:$0xff]
    %v475 = vld [vmem:[%s11 + $0x10] sm:$0xff]
    %v476 = vld [vmem:[%s11 + $0x18] sm:$0xff]
    %v477 = vld [vmem:[%s11 + $0x20] sm:$0xff]
    %v478 = vld [vmem:[%s11 + $0x28] sm:$0xff]
    %v479 = vld [vmem:[%s11 + $0x30] sm:$0xff]
    %v480 = vld [vmem:[%s11 + $0x38] sm:$0xff]
    %v481 = vld [vmem:[%s11 + $0x40] sm:$0xff]
    %v482 = vld [vmem:[%s11 + $0x48] sm:$0xff]
    %v483 = vld [vmem:[%s11 + $0x50] sm:$0xff]
    %v484 = vld [vmem:[%s11 + $0x58] sm:$0xff]
    %v485 = vld [vmem:[%s11 + $0x60] sm:$0xff]
    %v486 = vld [vmem:[%s11 + $0x68] sm:$0xff]
    %v487 = vld [vmem:[%s11 + $0x70] sm:$0xff]
    %v488 = vld [vmem:[%s11 + $0x78] sm:$0xff]
    %v489 = vld [vmem:[%s12] sm:$0xff]
    %v490 = vld [vmem:[%s12 + $0x8] sm:$0xff]
    %v491 = vld [vmem:[%s12 + $0x10] sm:$0xff]
    %v492 = vld [vmem:[%s12 + $0x18] sm:$0xff]
    %v493 = vld [vmem:[%s12 + $0x20] sm:$0xff]
    %v494 = vld [vmem:[%s12 + $0x28] sm:$0xff]
    %v495 = vld [vmem:[%s12 + $0x30] sm:$0xff]
    %v496 = vld [vmem:[%s12 + $0x38] sm:$0xff]
    %v497 = vld [vmem:[%s12 + $0x40] sm:$0xff]
    %v498 = vld [vmem:[%s12 + $0x48] sm:$0xff]
    %v499 = vld [vmem:[%s12 + $0x50] sm:$0xff]
    %v500 = vld [vmem:[%s12 + $0x58] sm:$0xff]
    %v501 = vld [vmem:[%s12 + $0x60] sm:$0xff]
    %v502 = vld [vmem:[%s12 + $0x68] sm:$0xff]
    %v503 = vld [vmem:[%s12 + $0x70] sm:$0xff]
    %v504 = vld [vmem:[%s12 + $0x78] sm:$0xff]
    %505 = vmatprep.subr.mxu0 0.0
    %506 = vmatpush1.msra.mxu0 %v489
    %507 = vmatprep.subr.mxu0 0.0
    %508 = vmatpush1.msra.mxu0 %v490
    %509 = vmatprep.subr.mxu0 0.0
    %510 = vmatpush1.msra.mxu0 %v491
    %511 = vmatprep.subr.mxu0 0.0
    %512 = vmatpush1.msra.mxu0 %v492
    %513 = vmatprep.subr.mxu0 0.0
    %514 = vmatpush1.msra.mxu0 %v493
    %515 = vmatprep.subr.mxu0 0.0
    %516 = vmatpush1.msra.mxu0 %v494
    %517 = vmatprep.subr.mxu0 0.0
    %518 = vmatpush1.msra.mxu0 %v495
    %519 = vmatprep.subr.mxu0 0.0
    %520 = vmatpush1.msra.mxu0 %v496
    %521 = vmatprep.subr.mxu0 0.0
    %522 = vmatpush1.msra.mxu0 %v497
    %523 = vmatprep.subr.mxu0 0.0
    %524 = vmatpush1.msra.mxu0 %v498
    %525 = vmatprep.subr.mxu0 0.0
    %526 = vmatpush1.msra.mxu0 %v499
    %527 = vmatprep.subr.mxu0 0.0
    %528 = vmatpush1.msra.mxu0 %v500
    %529 = vmatprep.subr.mxu0 0.0
    %530 = vmatpush1.msra.mxu0 %v501
    %531 = vmatprep.subr.mxu0 0.0
    %532 = vmatpush1.msra.mxu0 %v502
    %533 = vmatprep.subr.mxu0 0.0
    %534 = vmatpush1.msra.mxu0 %v503
    %535 = vmatprep.subr.mxu0 0.0
    %536 = vmatpush1.msra.mxu0 %v504
    %537 = vmatprep.subr.mxu0 0.0
    %538 = vmatpush1.msra.mxu0 0.0
    %539 = vmatprep.subr.mxu0 0.0
    %540 = vmatpush1.msra.mxu0 0.0
    %541 = vmatprep.subr.mxu0 0.0
    %542 = vmatpush1.msra.mxu0 0.0
    %543 = vmatprep.subr.mxu0 0.0
    %544 = vmatpush1.msra.mxu0 0.0
    %545 = vmatprep.subr.mxu0 0.0
    %546 = vmatpush1.msra.mxu0 0.0
    %547 = vmatprep.subr.mxu0 0.0
    %548 = vmatpush1.msra.mxu0 0.0
    %549 = vmatprep.subr.mxu0 0.0
    %550 = vmatpush1.msra.mxu0 0.0
    %551 = vmatprep.subr.mxu0 0.0
    %552 = vmatpush1.msra.mxu0 0.0
    %553 = vmatprep.subr.mxu0 0.0
    %554 = vmatpush1.msra.mxu0 0.0
    %555 = vmatprep.subr.mxu0 0.0
    %556 = vmatpush1.msra.mxu0 0.0
    %557 = vmatprep.subr.mxu0 0.0
    %558 = vmatpush1.msra.mxu0 0.0
    %559 = vmatprep.subr.mxu0 0.0
    %560 = vmatpush1.msra.mxu0 0.0
    %561 = vmatprep.subr.mxu0 0.0
    %562 = vmatpush1.msra.mxu0 0.0
    %563 = vmatprep.subr.mxu0 0.0
    %564 = vmatpush1.msra.mxu0 0.0
    %565 = vmatprep.subr.mxu0 0.0
    %566 = vmatpush1.msra.mxu0 0.0
    %567 = vmatprep.subr.mxu0 0.0
    %568 = vmatpush1.msra.mxu0 0.0
    %569 = vmatprep.mubr.f32.mxu0 0.0
    %570 = vmatmul.mubr.f32.gmra.mrb[0].mxu0 %v472
    %v571 = vpop.f32.mrb[0].mxu0
    %v572 = vadd.f32 0.0, %v571
    %v573 = vpop.f32.mrb[0].mxu0
    %574 = vdwg.mxu0
    %575 = vmatprep.subr.mxu0 0.0
    %576 = vmatpush1.msra.mxu0 %v473
    %577 = vmatprep.subr.mxu0 0.0
    %578 = vmatpush1.msra.mxu0 %v474
    %579 = vmatprep.subr.mxu0 0.0
    %580 = vmatpush1.msra.mxu0 %v475
    %581 = vmatprep.subr.mxu0 0.0
    %582 = vmatpush1.msra.mxu0 %v476
    %583 = vmatprep.subr.mxu0 0.0
    %584 = vmatpush1.msra.mxu0 %v477
    %585 = vmatprep.subr.mxu0 0.0
    %586 = vmatpush1.msra.mxu0 %v478
    %587 = vmatprep.subr.mxu0 0.0
    %588 = vmatpush1.msra.mxu0 %v479
    %589 = vmatprep.subr.mxu0 0.0
    %590 = vmatpush1.msra.mxu0 %v480
    %591 = vmatprep.subr.mxu0 0.0
    %592 = vmatpush1.msra.mxu0 %v481
    %593 = vmatprep.subr.mxu0 0.0
    %594 = vmatpush1.msra.mxu0 %v482
    %595 = vmatprep.subr.mxu0 0.0
    %596 = vmatpush1.msra.mxu0 %v483
    %597 = vmatprep.subr.mxu0 0.0
    %598 = vmatpush1.msra.mxu0 %v484
    %599 = vmatprep.subr.mxu0 0.0
    %600 = vmatpush1.msra.mxu0 %v485
    %601 = vmatprep.subr.mxu0 0.0
    %602 = vmatpush1.msra.mxu0 %v486
    %603 = vmatprep.subr.mxu0 0.0
    %604 = vmatpush1.msra.mxu0 %v487
    %605 = vmatprep.subr.mxu0 0.0
    %606 = vmatpush1.msra.mxu0 %v488
    %607 = vmatprep.subr.mxu0 0.0
    %608 = vmatpush1.msra.mxu0 0.0
    %609 = vmatprep.subr.mxu0 0.0
    %610 = vmatpush1.msra.mxu0 0.0
    %611 = vmatprep.subr.mxu0 0.0
    %612 = vmatpush1.msra.mxu0 0.0
    %613 = vmatprep.subr.mxu0 0.0
    %614 = vmatpush1.msra.mxu0 0.0
    %615 = vmatprep.subr.mxu0 0.0
    %616 = vmatpush1.msra.mxu0 0.0
    %617 = vmatprep.subr.mxu0 0.0
    %618 = vmatpush1.msra.mxu0 0.0
    %619 = vmatprep.subr.mxu0 0.0
    %620 = vmatpush1.msra.mxu0 0.0
    %621 = vmatprep.subr.mxu0 0.0
    %622 = vmatpush1.msra.mxu0 0.0
    %623 = vmatprep.subr.mxu0 0.0
    %624 = vmatpush1.msra.mxu0 0.0
    %625 = vmatprep.subr.mxu0 0.0
    %626 = vmatpush1.msra.mxu0 0.0
    %627 = vmatprep.subr.mxu0 0.0
    %628 = vmatpush1.msra.mxu0 0.0
    %629 = vmatprep.subr.mxu0 0.0
    %630 = vmatpush1.msra.mxu0 0.0
    %631 = vmatprep.subr.mxu0 0.0
    %632 = vmatpush1.msra.mxu0 0.0
    %633 = vmatprep.subr.mxu0 0.0
    %634 = vmatpush1.msra.mxu0 0.0
    %635 = vmatprep.subr.mxu0 0.0
    %636 = vmatpush1.msra.mxu0 0.0
    %637 = vmatprep.subr.mxu0 0.0
    %638 = vmatpush1.msra.mxu0 0.0
    %639 = vmatprep.mubr.f32.mxu0 0.0
    %640 = vmatmul.mubr.f32.gmra.mrb[0].mxu0 %v468
    %v641 = vpop.f32.mrb[0].mxu0
    %v642 = vadd.f32 %v572, %v641
    %v643 = vpop.f32.mrb[0].mxu0
    %644 = vdwg.mxu0
    %v645 = vld [vmem:[%s13] sm:$0x1]
    %v647 = vlaneseq
    %v648 = vshrl.u32 %v647, 7
    %v649 = vsub.s32 0, %v648
    %v650 = vrot.slane %v645, %v649
    %v652 = vadd.f32 %v642, %v650
    %v653 = vmax.f32 %v652, 0.0
    %v654 = vld [vmem:[%s14] sm:$0xff]
    %v655 = vld [vmem:[%s14 + $0x8] sm:$0xff]
    %v656 = vld [vmem:[%s14 + $0x10] sm:$0xff]
    %v657 = vld [vmem:[%s14 + $0x18] sm:$0xff]
    %v658 = vld [vmem:[%s15] sm:$0x1]
    %v660 = vlaneseq
    %v661 = vshrl.u32 %v660, 7
    %v662 = vsub.s32 0, %v661
    %v663 = vrot.slane %v658, %v662
    %vm665 = vcmask 261120
    %v667 = vsel %vm665, %v653, 0
    %669 = vmatprep.subr.mxu0 0.0
    %670 = vmatpush1.msra.mxu0 %v654
    %671 = vmatprep.subr.mxu0 0.0
    %672 = vmatpush1.msra.mxu0 %v655
    %673 = vmatprep.subr.mxu0 0.0
    %674 = vmatpush1.msra.mxu0 %v656
    %675 = vmatprep.subr.mxu0 0.0
    %676 = vmatpush1.msra.mxu0 %v657
    %677 = vmatprep.subr.mxu0 0.0
    %678 = vmatpush1.msra.mxu0 0.0
    %679 = vmatprep.subr.mxu0 0.0
    %680 = vmatpush1.msra.mxu0 0.0
    %681 = vmatprep.subr.mxu0 0.0
    %682 = vmatpush1.msra.mxu0 0.0
    %683 = vmatprep.subr.mxu0 0.0
    %684 = vmatpush1.msra.mxu0 0.0
    %685 = vmatprep.subr.mxu0 0.0
    %686 = vmatpush1.msra.mxu0 0.0
    %687 = vmatprep.subr.mxu0 0.0
    %688 = vmatpush1.msra.mxu0 0.0
    %689 = vmatprep.subr.mxu0 0.0
    %690 = vmatpush1.msra.mxu0 0.0
    %691 = vmatprep.subr.mxu0 0.0
    %692 = vmatpush1.msra.mxu0 0.0
    %693 = vmatprep.subr.mxu0 0.0
    %694 = vmatpush1.msra.mxu0 0.0
    %695 = vmatprep.subr.mxu0 0.0
    %696 = vmatpush1.msra.mxu0 0.0
    %697 = vmatprep.subr.mxu0 0.0
    %698 = vmatpush1.msra.mxu0 0.0
    %699 = vmatprep.subr.mxu0 0.0
    %700 = vmatpush1.msra.mxu0 0.0
    %701 = vmatprep.subr.mxu0 0.0
    %702 = vmatpush1.msra.mxu0 0.0
    %703 = vmatprep.subr.mxu0 0.0
    %704 = vmatpush1.msra.mxu0 0.0
    %705 = vmatprep.subr.mxu0 0.0
    %706 = vmatpush1.msra.mxu0 0.0
    %707 = vmatprep.subr.mxu0 0.0
    %708 = vmatpush1.msra.mxu0 0.0
    %709 = vmatprep.subr.mxu0 0.0
    %710 = vmatpush1.msra.mxu0 0.0
    %711 = vmatprep.subr.mxu0 0.0
    %712 = vmatpush1.msra.mxu0 0.0
    %713 = vmatprep.subr.mxu0 0.0
    %714 = vmatpush1.msra.mxu0 0.0
    %715 = vmatprep.subr.mxu0 0.0
    %716 = vmatpush1.msra.mxu0 0.0
    %717 = vmatprep.subr.mxu0 0.0
    %718 = vmatpush1.msra.mxu0 0.0
    %719 = vmatprep.subr.mxu0 0.0
    %720 = vmatpush1.msra.mxu0 0.0
    %721 = vmatprep.subr.mxu0 0.0
    %722 = vmatpush1.msra.mxu0 0.0
    %723 = vmatprep.subr.mxu0 0.0
    %724 = vmatpush1.msra.mxu0 0.0
    %725 = vmatprep.subr.mxu0 0.0
    %726 = vmatpush1.msra.mxu0 0.0
    %727 = vmatprep.subr.mxu0 0.0
    %728 = vmatpush1.msra.mxu0 0.0
    %729 = vmatprep.subr.mxu0 0.0
    %730 = vmatpush1.msra.mxu0 0.0
    %731 = vmatprep.subr.mxu0 0.0
    %732 = vmatpush1.msra.mxu0 0.0
    %733 = vmatprep.mubr.f32.mxu0 0.0
    %734 = vmatmul.mubr.f32.gmra.mrb[0].mxu0 %v667
    %v735 = vpop.f32.mrb[0].mxu0
    %v736 = vadd.f32 %v663, %v735
    %v737 = vpop.f32.mrb[0].mxu0
    %738 = vdwg.mxu0
    %v739 = vmax.f32 %v736, 0.0
    %v740 = vld [vmem:[%s16] sm:$0xff]
    %v741 = vld [vmem:[%s16 + $0x8] sm:$0xff]
    %v742 = vld [vmem:[%s17] sm:$0x1]
    %v744 = vlaneseq
    %v745 = vshrl.u32 %v744, 7
    %v746 = vsub.s32 0, %v745
    %v747 = vrot.slane %v742, %v746
    %v750 = vsel %vm128, %v739, 0
    %752 = vmatprep.subr.mxu0 0.0
    %753 = vmatpush1.msra.mxu0 %v740
    %754 = vmatprep.subr.mxu0 0.0
    %755 = vmatpush1.msra.mxu0 %v741
    %756 = vmatprep.subr.mxu0 0.0
    %757 = vmatpush1.msra.mxu0 0.0
    %758 = vmatprep.subr.mxu0 0.0
    %759 = vmatpush1.msra.mxu0 0.0
    %760 = vmatprep.subr.mxu0 0.0
    %761 = vmatpush1.msra.mxu0 0.0
    %762 = vmatprep.subr.mxu0 0.0
    %763 = vmatpush1.msra.mxu0 0.0
    %764 = vmatprep.subr.mxu0 0.0
    %765 = vmatpush1.msra.mxu0 0.0
    %766 = vmatprep.subr.mxu0 0.0
    %767 = vmatpush1.msra.mxu0 0.0
    %768 = vmatprep.subr.mxu0 0.0
    %769 = vmatpush1.msra.mxu0 0.0
    %770 = vmatprep.subr.mxu0 0.0
    %771 = vmatpush1.msra.mxu0 0.0
    %772 = vmatprep.subr.mxu0 0.0
    %773 = vmatpush1.msra.mxu0 0.0
    %774 = vmatprep.subr.mxu0 0.0
    %775 = vmatpush1.msra.mxu0 0.0
    %776 = vmatprep.subr.mxu0 0.0
    %777 = vmatpush1.msra.mxu0 0.0
    %778 = vmatprep.subr.mxu0 0.0
    %779 = vmatpush1.msra.mxu0 0.0
    %780 = vmatprep.subr.mxu0 0.0
    %781 = vmatpush1.msra.mxu0 0.0
    %782 = vmatprep.subr.mxu0 0.0
    %783 = vmatpush1.msra.mxu0 0.0
    %784 = vmatprep.subr.mxu0 0.0
    %785 = vmatpush1.msra.mxu0 0.0
    %786 = vmatprep.subr.mxu0 0.0
    %787 = vmatpush1.msra.mxu0 0.0
    %788 = vmatprep.subr.mxu0 0.0
    %789 = vmatpush1.msra.mxu0 0.0
    %790 = vmatprep.subr.mxu0 0.0
    %791 = vmatpush1.msra.mxu0 0.0
    %792 = vmatprep.subr.mxu0 0.0
    %793 = vmatpush1.msra.mxu0 0.0
    %794 = vmatprep.subr.mxu0 0.0
    %795 = vmatpush1.msra.mxu0 0.0
    %796 = vmatprep.subr.mxu0 0.0
    %797 = vmatpush1.msra.mxu0 0.0
    %798 = vmatprep.subr.mxu0 0.0
    %799 = vmatpush1.msra.mxu0 0.0
    %800 = vmatprep.subr.mxu0 0.0
    %801 = vmatpush1.msra.mxu0 0.0
    %802 = vmatprep.subr.mxu0 0.0
    %803 = vmatpush1.msra.mxu0 0.0
    %804 = vmatprep.subr.mxu0 0.0
    %805 = vmatpush1.msra.mxu0 0.0
    %806 = vmatprep.subr.mxu0 0.0
    %807 = vmatpush1.msra.mxu0 0.0
    %808 = vmatprep.subr.mxu0 0.0
    %809 = vmatpush1.msra.mxu0 0.0
    %810 = vmatprep.subr.mxu0 0.0
    %811 = vmatpush1.msra.mxu0 0.0
    %812 = vmatprep.subr.mxu0 0.0
    %813 = vmatpush1.msra.mxu0 0.0
    %814 = vmatprep.subr.mxu0 0.0
    %815 = vmatpush1.msra.mxu0 0.0
    %816 = vmatprep.mubr.f32.mxu0 0.0
    %817 = vmatmul.mubr.f32.gmra.mrb[0].mxu0 %v750
    %v818 = vpop.f32.mrb[0].mxu0
    %v819 = vadd.f32 %v747, %v818
    %v820 = vpop.f32.mrb[0].mxu0
    %821 = vdwg.mxu0
    %vm822 = vcmask 25600
    %v823 = vsel %vm822, %v819, -inf
    %824 = vmax.xlane.f32.xlu0 %v823
    %v825 = vpop.xlane.xlu0 %824
    %v826 = vsub.f32 %v819, %v825
    %v827 = vmul.f32 %v826, 1.442695
    %v828 = vpow.pop %v827
    %v829 = vsel %vm822, %v828, 0.0
    %830 = vadd.xlane.f32.xlu0 %v829
    %v831 = vpop.xlane.xlu0 %830
    %v832 = vrcp.pop %v831
    %v833 = vmul.f32 %v828, %v832
    %834 = vst.msk [vmem:[#allocation4] sm:$0x3] %vm822, %v833
    %v835 = vlog2.pop %v831
    %v836 = vmul.f32 %v835, 0.6931472
    %v837 = vsub.f32 %v826, %v836
    %838 = vst.msk [vmem:[#allocation2] sm:$0x3] %vm822, %v837
    // Predicated region
    $region74: #{net_forward.7} parent=1 // pred_check
      _
    $region75: #{net_forward.7} parent=1 // pred_check_branch
      %840 = sbr.rel (0) target = $region77
    $region76: #{net_forward.7} parent=1 // pred_region
      %s842 = ssub.s32 32, 32
      %843 = vsyncadd [#allocation3], %s842
      %s845 = sshll.u32 [#allocation2], 4
      %s846 = int_to_ptr.vmem [resolvable:$true] %s845
      %848 = dma.vmem_to_hbm [thread:$0]  %s846, 32, %s18, [#allocation3]
    $region77: #{net_forward.7} parent=1 // pred_fallthru
      _
    // Predicated region
    $region78: #{net_forward.7} parent=1 // pred_check
      _
    $region79: #{net_forward.7} parent=1 // pred_check_branch
      %850 = sbr.rel (0) target = $region81
    $region80: #{net_forward.7} parent=1 // pred_region
      %s852 = ssub.s32 32, 32
      %853 = vsyncadd [#allocation5], %s852
      %s855 = sshll.u32 [#allocation4], 4
      %s856 = int_to_ptr.vmem [resolvable:$true] %s855
      %858 = dma.vmem_to_hbm [thread:$0]  %s856, 32, %s19, [#allocation5]
    $region81: #{net_forward.7} parent=1 // pred_fallthru
      _
    // Predicated region
    $region82: #{net_forward.7} parent=1 // pred_check
      _
    $region83: #{net_forward.7} parent=1 // pred_check_branch
      %860 = sbr.rel (0) target = $region85
    $region84: #{net_forward.7} parent=1 // pred_region
      %861 = dma.done [#allocation3], 32
    $region85: #{net_forward.7} parent=1 // pred_fallthru
      _
    // Predicated region
    $region86: #{net_forward.7} parent=1 // pred_check
      _
    $region87: #{net_forward.7} parent=1 // pred_check_branch
      %863 = sbr.rel (0) target = $region89
    $region88: #{net_forward.7} parent=1 // pred_region
      %864 = dma.done [#allocation5], 32
    $region89: #{net_forward.7} parent=1 // pred_fallthru
      _
    %865 = vsyncpa [#allocation3], 1
    %866 = vsyncpa [#allocation5], 1

// kernel: net_forward.5
$region0: #{net_forward.5}
  #allocation0 [shape = 'u32[]', space=smem, size = 0x4, offset = 0x4, fixed_abs, tag = 'smem constant byte address 0x4 - core index']
  #allocation1 [shape = 'u32[144,128]{1,0:T(1,128)}', space=vmem, size = 0x12000, scoped, tag = 'internal scratch']
  #allocation2 [shape = 'f32[1,1]{1,0:T(1,128)S(1)}', space=vmem, size = 0x200, scoped, tag = 'scoped memory for net_forward.5']
  %s0 = inlined_call_operand.vmem [shape: s8[16,16], index: 0, kind: input, shape index: {}]
  %s1 = inlined_call_operand.vmem [shape: bf16[16,128], index: 1, kind: input, shape index: {}]
  %s2 = inlined_call_operand.vmem [shape: f32[16,1], index: 2, kind: input, shape index: {}]
  %s3 = inlined_call_operand.vmem [shape: f32[1,16], index: 3, kind: input, shape index: {}]
  %s4 = inlined_call_operand.vmem [shape: f32[16,1], index: 4, kind: input, shape index: {}]
  %s5 = inlined_call_operand.vmem [shape: s32[16,1], index: 5, kind: input, shape index: {}]
  %s6 = inlined_call_operand.vmem [shape: s32[1,16], index: 6, kind: input, shape index: {}]
  %s7 = inlined_call_operand.vmem [shape: f32[2,16], index: 7, kind: input, shape index: {}]
  %s8 = inlined_call_operand.vmem [shape: f32[128,128], index: 8, kind: input, shape index: {}]
  %s9 = inlined_call_operand.vmem [shape: f32[1,128], index: 9, kind: input, shape index: {}]
  %s10 = inlined_call_operand.vmem [shape: f32[128,1], index: 10, kind: input, shape index: {}]
  %s11 = inlined_call_operand.<no memory space> [shape: f32[1,1], index: 11, kind: input, shape index: {}]
  %s12 = inlined_call_operand.vmem [shape: f32[2,128], index: 12, kind: output, shape index: {0}]
  %s13 = inlined_call_operand.vmem [shape: f32[2,128], index: 13, kind: output, shape index: {1}]
  %s14 = inlined_call_operand.vmem [shape: bf16[16,128], index: 14, kind: output, shape index: {2}]
  %s15 = inlined_call_operand.vmem [shape: f32[16,1], index: 15, kind: output, shape index: {3}]
  %s16 = inlined_call_operand.vmem [shape: f32[16,1], index: 16, kind: output, shape index: {4}]
  %17 = xla_tuple %s12, %s13, %s14, %s15, %s16
  %s18 = sld [smem:[#allocation0]]
  $region90: #{net_forward.5} parent=0
    _
  %s20 = ssub.s32 1, %s18
  %s21 = scalar_select 0, %s20, %s18
  %v22 = vstv %s11
  %23 = vst [vmem:[#allocation2] sm:$0x1] %v22
  // Predicated region
  $region2: #{net_forward.5} parent=0 // pred_check
    _
  $region3: #{net_forward.5} parent=0 // pred_check_branch
    %25 = sbr.rel (0) target = $region5
  $region4: #{net_forward.5} parent=0 // pred_region
    _
  $region5: #{net_forward.5} parent=0 // pred_fallthru
    _
  // Predicated region
  $region6: #{net_forward.5} parent=0 // pred_check
    _
  $region7: #{net_forward.5} parent=0 // pred_check_branch
    %27 = sbr.rel (0) target = $region9
  $region8: #{net_forward.5} parent=0 // pred_region
    _
  $region9: #{net_forward.5} parent=0 // pred_fallthru
    _
  // Predicated region
  $region10: #{net_forward.5} parent=0 // pred_check
    _
  $region11: #{net_forward.5} parent=0 // pred_check_branch
    %29 = sbr.rel (0) target = $region13
  $region12: #{net_forward.5} parent=0 // pred_region
    _
  $region13: #{net_forward.5} parent=0 // pred_fallthru
    _
  // Predicated region
  $region14: #{net_forward.5} parent=0 // pred_check
    _
  $region15: #{net_forward.5} parent=0 // pred_check_branch
    %31 = sbr.rel (0) target = $region17
  $region16: #{net_forward.5} parent=0 // pred_region
    _
  $region17: #{net_forward.5} parent=0 // pred_fallthru
    _
  // Predicated region
  $region18: #{net_forward.5} parent=0 // pred_check
    _
  $region19: #{net_forward.5} parent=0 // pred_check_branch
    %33 = sbr.rel (0) target = $region21
  $region20: #{net_forward.5} parent=0 // pred_region
    _
  $region21: #{net_forward.5} parent=0 // pred_fallthru
    _
  // Predicated region
  $region22: #{net_forward.5} parent=0 // pred_check
    _
  $region23: #{net_forward.5} parent=0 // pred_check_branch
    %35 = sbr.rel (0) target = $region25
  $region24: #{net_forward.5} parent=0 // pred_region
    _
  $region25: #{net_forward.5} parent=0 // pred_fallthru
    _
  // Predicated region
  $region26: #{net_forward.5} parent=0 // pred_check
    _
  $region27: #{net_forward.5} parent=0 // pred_check_branch
    %37 = sbr.rel (0) target = $region29
  $region28: #{net_forward.5} parent=0 // pred_region
    _
  $region29: #{net_forward.5} parent=0 // pred_fallthru
    _
  // Predicated region
  $region30: #{net_forward.5} parent=0 // pred_check
    _
  $region31: #{net_forward.5} parent=0 // pred_check_branch
    %39 = sbr.rel (0) target = $region33
  $region32: #{net_forward.5} parent=0 // pred_region
    _
  $region33: #{net_forward.5} parent=0 // pred_fallthru
    _
  // Predicated region
  $region34: #{net_forward.5} parent=0 // pred_check
    _
  $region35: #{net_forward.5} parent=0 // pred_check_branch
    %41 = sbr.rel (0) target = $region37
  $region36: #{net_forward.5} parent=0 // pred_region
    _
  $region37: #{net_forward.5} parent=0 // pred_fallthru
    _
  // Predicated region
  $region38: #{net_forward.5} parent=0 // pred_check
    _
  $region39: #{net_forward.5} parent=0 // pred_check_branch
    %43 = sbr.rel (0) target = $region41
  $region40: #{net_forward.5} parent=0 // pred_region
    _
  $region41: #{net_forward.5} parent=0 // pred_fallthru
    _
  // Predicated region
  $region42: #{net_forward.5} parent=0 // pred_check
    _
  $region43: #{net_forward.5} parent=0 // pred_check_branch
    %45 = sbr.rel (0) target = $region45
  $region44: #{net_forward.5} parent=0 // pred_region
    _
  $region45: #{net_forward.5} parent=0 // pred_fallthru
    _
  // Predicated region
  $region46: #{net_forward.5} parent=0 // pred_check
    _
  $region47: #{net_forward.5} parent=0 // pred_check_branch
    %47 = sbr.rel (0) target = $region49
  $region48: #{net_forward.5} parent=0 // pred_region
    _
  $region49: #{net_forward.5} parent=0 // pred_fallthru
    _
  %v49 = vld [vmem:[%s0] sm:$0x3]
  %v50 = vld [vmem:[%s0 + $0x2] sm:$0x3]
  %v51 = vunpack.c.l.s8.bf16 %v49
  %v52 = vunpack.c.l.s8.bf16 %v50
  %v53 = vld [vmem:[%s1] sm:$0xf]
  %v54 = vld [vmem:[%s1 + $0x4] sm:$0xf]
  %v55 = vunpack.c.l.bf16 %v53
  %v56 = vunpack.c.l.bf16 %v54
  %v57 = vld [vmem:[%s2] sm:$0xff]
  %v58 = vld [vmem:[%s2 + $0x8] sm:$0xff]
  %v59 = vld [vmem:[%s3] sm:$0x1]
  %v60 = vld [vmem:[%s4] sm:$0xff]
  %v61 = vld [vmem:[%s4 + $0x8] sm:$0xff]
  %v62 = vld [vmem:[%s5] sm:$0xff]
  %v63 = vld [vmem:[%s5 + $0x8] sm:$0xff]
  %v64 = vld [vmem:[%s6] sm:$0x1]
  %v65 = vld [vmem:[%s7] sm:$0x3]
  %vm66 = vcmp.gt.f32.partialorder %v60, 0.5
  %vm67 = vcmp.gt.f32.partialorder %v61, 0.5
  %68 = vset.pattern.permute.xlu0 0
  %69 = vperm.xlu0 %68, %v62
  %v70 = vpop.permute.xlu0 %69
  %71 = vset.pattern.permute.xlu0 0
  %72 = vperm.xlu0 %71, %v63
  %v73 = vpop.permute.xlu0 %72
  %v74 = vlaneseq
  %v75 = vshrl.u32 %v74, 7
  %v76 = vsub.s32 0, %v75
  %v77 = vrot.slane %v64, %v76
  %vm78 = vcmp.eq.s32.totalorder %v70, %v77
  %vm79 = vcmp.eq.s32.totalorder %v73, %v77
  %v80 = vlaneseq
  %v81 = vshrl.u32 %v80, 7
  %v82 = vadd.s32 %v81, 8
  %v83 = vlaneseq
  %v84 = vand.u32 %v83, 127
  %v86 = vlaneseq
  %v87 = vshrl.u32 %v86, 7
  %v88 = vsub.s32 0, %v87
  %v89 = vrot.slane %v59, %v88
  %92 = vset.pattern.permute.xlu0 0
  %93 = vperm.xlu0 %92, %v57
  %v94 = vpop.permute.xlu0 %93
  %97 = vset.pattern.permute.xlu0 0
  %98 = vperm.xlu0 %97, %v58
  %v99 = vpop.permute.xlu0 %98
  %vm101 = vcmp.gt.f32.partialorder %v89, %v94
  %vm102 = vcmp.gt.f32.partialorder %v89, %v99
  %vm103 = vcmp.eq.f32.partialorder %v89, %v94
  %vm104 = vcmp.eq.f32.partialorder %v89, %v99
  %vm105 = vcmp.lt.s32.totalorder %v84, %v81
  %vm106 = vcmp.lt.s32.totalorder %v84, %v82
  %vm107 = vmand %vm103, %vm105
  %vm108 = vmand %vm104, %vm106
  %vm109 = vmor %vm101, %vm107
  %vm110 = vmor %vm102, %vm108
  %v111 = vpack.c.bf16 %v61, %v60
  %vm112 = vmand %vm78, %vm109
  %vm113 = vmand %vm79, %vm110
  %v114 = vsel %vm112, 1.0, 0.0
  %v115 = vsel %vm113, 1.0, 0.0
  %v116 = vpack.c.bf16 %v115, %v114
  %vm117 = vcmask 130048
  %v119 = vsel %vm117, %v116, 0
  %121 = vmatprep.subr.bf16.mxu0 0
  %122 = vmatpush1.bf16.msra.mxu0 %v111
  %123 = vmatprep.subr.bf16.mxu0 0
  %124 = vmatpush1.bf16.msra.mxu0 0
  %125 = vmatprep.subr.bf16.mxu0 0
  %126 = vmatpush1.bf16.msra.mxu0 0
  %127 = vmatprep.subr.bf16.mxu0 0
  %128 = vmatpush1.bf16.msra.mxu0 0
  %129 = vmatprep.subr.bf16.mxu0 0
  %130 = vmatpush1.bf16.msra.mxu0 0
  %131 = vmatprep.subr.bf16.mxu0 0
  %132 = vmatpush1.bf16.msra.mxu0 0
  %133 = vmatprep.subr.bf16.mxu0 0
  %134 = vmatpush1.bf16.msra.mxu0 0
  %135 = vmatprep.subr.bf16.mxu0 0
  %136 = vmatpush1.bf16.msra.mxu0 0
  %137 = vmatprep.subr.bf16.mxu0 0
  %138 = vmatpush1.bf16.msra.mxu0 0
  %139 = vmatprep.subr.bf16.mxu0 0
  %140 = vmatpush1.bf16.msra.mxu0 0
  %141 = vmatprep.subr.bf16.mxu0 0
  %142 = vmatpush1.bf16.msra.mxu0 0
  %143 = vmatprep.subr.bf16.mxu0 0
  %144 = vmatpush1.bf16.msra.mxu0 0
  %145 = vmatprep.subr.bf16.mxu0 0
  %146 = vmatpush1.bf16.msra.mxu0 0
  %147 = vmatprep.subr.bf16.mxu0 0
  %148 = vmatpush1.bf16.msra.mxu0 0
  %149 = vmatprep.subr.bf16.mxu0 0
  %150 = vmatpush1.bf16.msra.mxu0 0
  %151 = vmatprep.subr.bf16.mxu0 0
  %152 = vmatpush1.bf16.msra.mxu0 0
  %153 = vmatprep.mubr.bf16.mxu0 0
  %154 = vmatmul.mubr.bf16.gmra.mrb[0].mxu0 %v119
  %v155 = vpop.f32.mrb[0].mxu0
  %v156 = vadd.f32 0.0, %v155
  %v157 = vpop.f32.mrb[0].mxu0
  %v158 = vpop.f32.mrb[0].mxu0
  %v159 = vadd.f32 0.0, %v158
  %v160 = vpop.f32.mrb[0].mxu0
  %161 = vdwg.mxu0
  %v162 = vsel %vm78, 1.0, 0.0
  %v163 = vsel %vm79, 1.0, 0.0
  %v164 = vpack.c.bf16 %v163, %v162
  %v166 = vsel %vm117, %v164, 0
  %168 = vmatprep.subr.bf16.mxu0 0
  %169 = vmatpush1.bf16.msra.mxu0 %v111
  %170 = vmatprep.subr.bf16.mxu0 0
  %171 = vmatpush1.bf16.msra.mxu0 0
  %172 = vmatprep.subr.bf16.mxu0 0
  %173 = vmatpush1.bf16.msra.mxu0 0
  %174 = vmatprep.subr.bf16.mxu0 0
  %175 = vmatpush1.bf16.msra.mxu0 0
  %176 = vmatprep.subr.bf16.mxu0 0
  %177 = vmatpush1.bf16.msra.mxu0 0
  %178 = vmatprep.subr.bf16.mxu0 0
  %179 = vmatpush1.bf16.msra.mxu0 0
  %180 = vmatprep.subr.bf16.mxu0 0
  %181 = vmatpush1.bf16.msra.mxu0 0
  %182 = vmatprep.subr.bf16.mxu0 0
  %183 = vmatpush1.bf16.msra.mxu0 0
  %184 = vmatprep.subr.bf16.mxu0 0
  %185 = vmatpush1.bf16.msra.mxu0 0
  %186 = vmatprep.subr.bf16.mxu0 0
  %187 = vmatpush1.bf16.msra.mxu0 0
  %188 = vmatprep.subr.bf16.mxu0 0
  %189 = vmatpush1.bf16.msra.mxu0 0
  %190 = vmatprep.subr.bf16.mxu0 0
  %191 = vmatpush1.bf16.msra.mxu0 0
  %192 = vmatprep.subr.bf16.mxu0 0
  %193 = vmatpush1.bf16.msra.mxu0 0
  %194 = vmatprep.subr.bf16.mxu0 0
  %195 = vmatpush1.bf16.msra.mxu0 0
  %196 = vmatprep.subr.bf16.mxu0 0
  %197 = vmatpush1.bf16.msra.mxu0 0
  %198 = vmatprep.subr.bf16.mxu0 0
  %199 = vmatpush1.bf16.msra.mxu0 0
  %200 = vmatprep.mubr.bf16.mxu0 0
  %201 = vmatmul.mubr.bf16.gmra.mrb[0].mxu0 %v166
  %v202 = vpop.f32.mrb[0].mxu0
  %v203 = vadd.f32 0.0, %v202
  %v204 = vpop.f32.mrb[0].mxu0
  %v205 = vpop.f32.mrb[0].mxu0
  %v206 = vadd.f32 0.0, %v205
  %v207 = vpop.f32.mrb[0].mxu0
  %208 = vdwg.mxu0
  %v209 = vmul.f32 %v203, 0.5
  %v210 = vmul.f32 %v206, 0.5
  %v211 = vceil.f32 %v209
  %v212 = vceil.f32 %v210
  %vm213 = vcmp.lt.f32.partialorder %v156, %v211
  %vm214 = vcmp.lt.f32.partialorder %v159, %v212
  %vm215 = vmand %vm66, %vm213
  %vm216 = vmand %vm67, %vm214
  %v217 = vsel %vm215, 1.0, 0.0
  %v218 = vsel %vm216, 1.0, 0.0
  %v219 = vtanh.pop %v57
  %v220 = vtanh.pop %v58
  %222 = vset.pattern.permute.xlu0 0
  %223 = vperm.xlu0 %222, %v219
  %v224 = vpop.permute.xlu0 %223
  %227 = vset.pattern.permute.xlu0 0
  %228 = vperm.xlu0 %227, %v220
  %v229 = vpop.permute.xlu0 %228
  %v231 = vmul.f32 %v55, %v224
  %v232 = vmul.f32 %v56, %v229
  %234 = vset.pattern.permute.xlu0 0
  %235 = vperm.xlu0 %234, %v217
  %v236 = vpop.permute.xlu0 %235
  %239 = vset.pattern.permute.xlu0 0
  %240 = vperm.xlu0 %239, %v218
  %v241 = vpop.permute.xlu0 %240
  %v243 = vmul.f32 %v231, %v236
  %v244 = vmul.f32 %v232, %v241
  %v246 = vsel %vm117, %v65, 0
  %248 = vmatprep.subr.mxu0 0.0
  %249 = vmatpush1.msra.mxu0 %v217
  %250 = vmatprep.subr.mxu0 0.0
  %251 = vmatpush1.msra.mxu0 %v218
  %252 = vmatprep.subr.mxu0 0.0
  %253 = vmatpush1.msra.mxu0 0.0
  %254 = vmatprep.subr.mxu0 0.0
  %255 = vmatpush1.msra.mxu0 0.0
  %256 = vmatprep.subr.mxu0 0.0
  %257 = vmatpush1.msra.mxu0 0.0
  %258 = vmatprep.subr.mxu0 0.0
  %259 = vmatpush1.msra.mxu0 0.0
  %260 = vmatprep.subr.mxu0 0.0
  %261 = vmatpush1.msra.mxu0 0.0
  %262 = vmatprep.subr.mxu0 0.0
  %263 = vmatpush1.msra.mxu0 0.0
  %264 = vmatprep.subr.mxu0 0.0
  %265 = vmatpush1.msra.mxu0 0.0
  %266 = vmatprep.subr.mxu0 0.0
  %267 = vmatpush1.msra.mxu0 0.0
  %268 = vmatprep.subr.mxu0 0.0
  %269 = vmatpush1.msra.mxu0 0.0
  %270 = vmatprep.subr.mxu0 0.0
  %271 = vmatpush1.msra.mxu0 0.0
  %272 = vmatprep.subr.mxu0 0.0
  %273 = vmatpush1.msra.mxu0 0.0
  %274 = vmatprep.subr.mxu0 0.0
  %275 = vmatpush1.msra.mxu0 0.0
  %276 = vmatprep.subr.mxu0 0.0
  %277 = vmatpush1.msra.mxu0 0.0
  %278 = vmatprep.subr.mxu0 0.0
  %279 = vmatpush1.msra.mxu0 0.0
  %280 = vmatprep.subr.mxu0 0.0
  %281 = vmatpush1.msra.mxu0 0.0
  %282 = vmatprep.subr.mxu0 0.0
  %283 = vmatpush1.msra.mxu0 0.0
  %284 = vmatprep.subr.mxu0 0.0
  %285 = vmatpush1.msra.mxu0 0.0
  %286 = vmatprep.subr.mxu0 0.0
  %287 = vmatpush1.msra.mxu0 0.0
  %288 = vmatprep.subr.mxu0 0.0
  %289 = vmatpush1.msra.mxu0 0.0
  %290 = vmatprep.subr.mxu0 0.0
  %291 = vmatpush1.msra.mxu0 0.0
  %292 = vmatprep.subr.mxu0 0.0
  %293 = vmatpush1.msra.mxu0 0.0
  %294 = vmatprep.subr.mxu0 0.0
  %295 = vmatpush1.msra.mxu0 0.0
  %296 = vmatprep.subr.mxu0 0.0
  %297 = vmatpush1.msra.mxu0 0.0
  %298 = vmatprep.subr.mxu0 0.0
  %299 = vmatpush1.msra.mxu0 0.0
  %300 = vmatprep.subr.mxu0 0.0
  %301 = vmatpush1.msra.mxu0 0.0
  %302 = vmatprep.subr.mxu0 0.0
  %303 = vmatpush1.msra.mxu0 0.0
  %304 = vmatprep.subr.mxu0 0.0
  %305 = vmatpush1.msra.mxu0 0.0
  %306 = vmatprep.subr.mxu0 0.0
  %307 = vmatpush1.msra.mxu0 0.0
  %308 = vmatprep.subr.mxu0 0.0
  %309 = vmatpush1.msra.mxu0 0.0
  %310 = vmatprep.subr.mxu0 0.0
  %311 = vmatpush1.msra.mxu0 0.0
  %312 = vmatprep.mubr.f32.mxu0 0.0
  %313 = vmatmul.mubr.f32.gmra.mrb[0].mxu0 %v246
  %v314 = vpop.f32.mrb[0].mxu0
  %v315 = vadd.f32 0.0, %v314
  %v316 = vpop.f32.mrb[0].mxu0
  %317 = vdwg.mxu0
  %vm318 = vcmp.gt.f32.partialorder %v315, 0.0
  %v319 = vrcp.pop %v315
  %v320 = vmul.f32 1.0, %v319
  %v321 = vsel %vm318, %v320, 0.0
  %322 = vmatprep.subr.mxu0 0.0
  %323 = vmatpush1.msra.mxu0 %v243
  %324 = vmatprep.subr.mxu0 0.0
  %325 = vmatpush1.msra.mxu0 %v244
  %326 = vmatprep.subr.mxu0 0.0
  %327 = vmatpush1.msra.mxu0 0.0
  %328 = vmatprep.subr.mxu0 0.0
  %329 = vmatpush1.msra.mxu0 0.0
  %330 = vmatprep.subr.mxu0 0.0
  %331 = vmatpush1.msra.mxu0 0.0
  %332 = vmatprep.subr.mxu0 0.0
  %333 = vmatpush1.msra.mxu0 0.0
  %334 = vmatprep.subr.mxu0 0.0
  %335 = vmatpush1.msra.mxu0 0.0
  %336 = vmatprep.subr.mxu0 0.0
  %337 = vmatpush1.msra.mxu0 0.0
  %338 = vmatprep.subr.mxu0 0.0
  %339 = vmatpush1.msra.mxu0 0.0
  %340 = vmatprep.subr.mxu0 0.0
  %341 = vmatpush1.msra.mxu0 0.0
  %342 = vmatprep.subr.mxu0 0.0
  %343 = vmatpush1.msra.mxu0 0.0
  %344 = vmatprep.subr.mxu0 0.0
  %345 = vmatpush1.msra.mxu0 0.0
  %346 = vmatprep.subr.mxu0 0.0
  %347 = vmatpush1.msra.mxu0 0.0
  %348 = vmatprep.subr.mxu0 0.0
  %349 = vmatpush1.msra.mxu0 0.0
  %350 = vmatprep.subr.mxu0 0.0
  %351 = vmatpush1.msra.mxu0 0.0
  %352 = vmatprep.subr.mxu0 0.0
  %353 = vmatpush1.msra.mxu0 0.0
  %354 = vmatprep.subr.mxu0 0.0
  %355 = vmatpush1.msra.mxu0 0.0
  %356 = vmatprep.subr.mxu0 0.0
  %357 = vmatpush1.msra.mxu0 0.0
  %358 = vmatprep.subr.mxu0 0.0
  %359 = vmatpush1.msra.mxu0 0.0
  %360 = vmatprep.subr.mxu0 0.0
  %361 = vmatpush1.msra.mxu0 0.0
  %362 = vmatprep.subr.mxu0 0.0
  %363 = vmatpush1.msra.mxu0 0.0
  %364 = vmatprep.subr.mxu0 0.0
  %365 = vmatpush1.msra.mxu0 0.0
  %366 = vmatprep.subr.mxu0 0.0
  %367 = vmatpush1.msra.mxu0 0.0
  %368 = vmatprep.subr.mxu0 0.0
  %369 = vmatpush1.msra.mxu0 0.0
  %370 = vmatprep.subr.mxu0 0.0
  %371 = vmatpush1.msra.mxu0 0.0
  %372 = vmatprep.subr.mxu0 0.0
  %373 = vmatpush1.msra.mxu0 0.0
  %374 = vmatprep.subr.mxu0 0.0
  %375 = vmatpush1.msra.mxu0 0.0
  %376 = vmatprep.subr.mxu0 0.0
  %377 = vmatpush1.msra.mxu0 0.0
  %378 = vmatprep.subr.mxu0 0.0
  %379 = vmatpush1.msra.mxu0 0.0
  %380 = vmatprep.subr.mxu0 0.0
  %381 = vmatpush1.msra.mxu0 0.0
  %382 = vmatprep.subr.mxu0 0.0
  %383 = vmatpush1.msra.mxu0 0.0
  %384 = vmatprep.subr.mxu0 0.0
  %385 = vmatpush1.msra.mxu0 0.0
  %386 = vmatprep.mubr.f32.mxu0 0.0
  %387 = vmatmul.mubr.f32.gmra.mrb[0].mxu0 %v246
  %v388 = vpop.f32.mrb[0].mxu0
  %v389 = vadd.f32 0.0, %v388
  %v390 = vpop.f32.mrb[0].mxu0
  %391 = vdwg.mxu0
  %393 = vset.pattern.permute.xlu0 0
  %394 = vperm.xlu0 %393, %v321
  %v395 = vpop.permute.xlu0 %394
  %v397 = vmul.f32 %v389, %v395
  %vm398 = vcmp.eq.s32.totalorder %v62, 0
  %vm399 = vcmp.eq.s32.totalorder %v63, 0
  %vm400 = vcmp.gt.f32.partialorder %v217, 0.5
  %vm401 = vcmp.gt.f32.partialorder %v218, 0.5
  %vm402 = vmand %vm398, %vm400
  %vm403 = vmand %vm399, %vm401
  %v404 = vsel %vm402, 1, 0
  %v405 = vsel %vm403, 1, 0
  %406 = vset.pattern.permute.xlu0 0
  %407 = vperm.xlu0 %406, %v404
  %v408 = vpop.permute.xlu0 %407
  %409 = vset.pattern.permute.xlu0 0
  %410 = vperm.xlu0 %409, %v405
  %v411 = vpop.permute.xlu0 %410
  %vm412 = vcmp.eq.s32.totalorder %v408, 1
  %vm413 = vcmp.eq.s32.totalorder %v411, 1
  %v414 = vsel %vm412, %v243, -1e+30
  %v415 = vsel %vm413, %v244, -1e+30
  %v416 = vmax.f32 %v414, %v415
  %v417 = vrot.slane %v416, 4
  %v418 = vmax.f32 %v416, %v417
  %v419 = vrot.slane %v418, 2
  %v420 = vmax.f32 %v418, %v419
  %v421 = vrot.slane %v420, 1
  %v422 = vmax.f32 %v420, %v421
  %vm423 = vcmp.eq.s32.totalorder %v62, 1
  %vm424 = vcmp.eq.s32.totalorder %v63, 1
  %vm425 = vmand %vm423, %vm400
  %vm426 = vmand %vm424, %vm401
  %v427 = vsel %vm425, 1, 0
  %v428 = vsel %vm426, 1, 0
  %429 = vset.pattern.permute.xlu0 0
  %430 = vperm.xlu0 %429, %v427
  %v431 = vpop.permute.xlu0 %430
  %432 = vset.pattern.permute.xlu0 0
  %433 = vperm.xlu0 %432, %v428
  %v434 = vpop.permute.xlu0 %433
  %vm435 = vcmp.eq.s32.totalorder %v431, 1
  %vm436 = vcmp.eq.s32.totalorder %v434, 1
  %v437 = vsel %vm435, %v243, -1e+30
  %v438 = vsel %vm436, %v244, -1e+30
  %v439 = vmax.f32 %v437, %v438
  %v440 = vrot.slane %v439, 4
  %v441 = vmax.f32 %v439, %v440
  %v442 = vrot.slane %v441, 2
  %v443 = vmax.f32 %v441, %v442
  %v444 = vrot.slane %v443, 1
  %v445 = vmax.f32 %v443, %v444
  %vm446 = vcmask 1040384
  %v447 = vsel %vm446, %v422, %v445
  %v448 = vsel %vm318, 1, 0
  %449 = vset.pattern.permute.xlu0 0
  %450 = vperm.xlu0 %449, %v448
  %v451 = vpop.permute.xlu0 %450
  %vm452 = vcmp.eq.s32.totalorder %v451, 1
  %v453 = vsel %vm452, %v447, 0.0
  %454 = vst [vmem:[%s12] sm:$0x3] %v453
  %455 = vst [vmem:[%s13] sm:$0x3] %v397
  %vm456 = vcmask 7168
  %457 = vst.msk [vmem:[%s16] sm:$0xff] %vm456, %v217
  %458 = vst.msk [vmem:[%s16 + $0x8] sm:$0xff] %vm456, %v218
  %v459 = vpack.c.bf16 %v218, %v217
  %v462 = vunpack.c.l.b16 %v51
  %v463 = vunpack.c.l.b16 %v52
  %v464 = vpack.c.b16 %v463, %v462
  %v466 = vsel %vm117, %v464, 0
  %468 = vmatprep.subr.bf16.mxu0 0
  %469 = vmatpush1.bf16.msra.mxu0 %v459
  %470 = vmatprep.subr.bf16.mxu0 0
  %471 = vmatpush1.bf16.msra.mxu0 0
  %472 = vmatprep.subr.bf16.mxu0 0
  %473 = vmatpush1.bf16.msra.mxu0 0
  %474 = vmatprep.subr.bf16.mxu0 0
  %475 = vmatpush1.bf16.msra.mxu0 0
  %476 = vmatprep.subr.bf16.mxu0 0
  %477 = vmatpush1.bf16.msra.mxu0 0
  %478 = vmatprep.subr.bf16.mxu0 0
  %479 = vmatpush1.bf16.msra.mxu0 0
  %480 = vmatprep.subr.bf16.mxu0 0
  %481 = vmatpush1.bf16.msra.mxu0 0
  %482 = vmatprep.subr.bf16.mxu0 0
  %483 = vmatpush1.bf16.msra.mxu0 0
  %484 = vmatprep.subr.bf16.mxu0 0
  %485 = vmatpush1.bf16.msra.mxu0 0
  %486 = vmatprep.subr.bf16.mxu0 0
  %487 = vmatpush1.bf16.msra.mxu0 0
  %488 = vmatprep.subr.bf16.mxu0 0
  %489 = vmatpush1.bf16.msra.mxu0 0
  %490 = vmatprep.subr.bf16.mxu0 0
  %491 = vmatpush1.bf16.msra.mxu0 0
  %492 = vmatprep.subr.bf16.mxu0 0
  %493 = vmatpush1.bf16.msra.mxu0 0
  %494 = vmatprep.subr.bf16.mxu0 0
  %495 = vmatpush1.bf16.msra.mxu0 0
  %496 = vmatprep.subr.bf16.mxu0 0
  %497 = vmatpush1.bf16.msra.mxu0 0
  %498 = vmatprep.subr.bf16.mxu0 0
  %499 = vmatpush1.bf16.msra.mxu0 0
  %500 = vmatprep.mubr.bf16.mxu0 0
  %501 = vmatmul.mubr.bf16.gmra.mrb[0].mxu0 %v466
  %v502 = vpop.f32.mrb[0].mxu0
  %v503 = vadd.f32 1.0, %v502
  %v504 = vpop.f32.mrb[0].mxu0
  %v505 = vpop.f32.mrb[0].mxu0
  %v506 = vadd.f32 1.0, %v505
  %v507 = vpop.f32.mrb[0].mxu0
  %508 = vdwg.mxu0
  %v509 = vmul.f32 %v217, %v503
  %v510 = vmul.f32 %v218, %v506
  %vm511 = vcmp.gt.f32.partialorder %v509, 0.0
  %vm512 = vcmp.gt.f32.partialorder %v510, 0.0
  %v513 = vrsqrt.pop %v509
  %v514 = vrsqrt.pop %v510
  %v515 = vsel %vm511, %v513, 0.0
  %v516 = vsel %vm512, %v514, 0.0
  %v517 = vld [vmem:[%s8] sm:$0xff]
  %v518 = vld [vmem:[%s8 + $0x8] sm:$0xff]
  %v519 = vld [vmem:[%s8 + $0x10] sm:$0xff]
  %v520 = vld [vmem:[%s8 + $0x18] sm:$0xff]
  %v521 = vld [vmem:[%s8 + $0x20] sm:$0xff]
  %v522 = vld [vmem:[%s8 + $0x28] sm:$0xff]
  %v523 = vld [vmem:[%s8 + $0x30] sm:$0xff]
  %v524 = vld [vmem:[%s8 + $0x38] sm:$0xff]
  %v525 = vld [vmem:[%s8 + $0x40] sm:$0xff]
  %v526 = vld [vmem:[%s8 + $0x48] sm:$0xff]
  %v527 = vld [vmem:[%s8 + $0x50] sm:$0xff]
  %v528 = vld [vmem:[%s8 + $0x58] sm:$0xff]
  %v529 = vld [vmem:[%s8 + $0x60] sm:$0xff]
  %v530 = vld [vmem:[%s8 + $0x68] sm:$0xff]
  %v531 = vld [vmem:[%s8 + $0x70] sm:$0xff]
  %v532 = vld [vmem:[%s8 + $0x78] sm:$0xff]
  %v533 = vld [vmem:[%s9] sm:$0x1]
  %v534 = vld [vmem:[%s10] sm:$0xff]
  %v535 = vld [vmem:[%s10 + $0x8] sm:$0xff]
  %v536 = vld [vmem:[%s10 + $0x10] sm:$0xff]
  %v537 = vld [vmem:[%s10 + $0x18] sm:$0xff]
  %v538 = vld [vmem:[%s10 + $0x20] sm:$0xff]
  %v539 = vld [vmem:[%s10 + $0x28] sm:$0xff]
  %v540 = vld [vmem:[%s10 + $0x30] sm:$0xff]
  %v541 = vld [vmem:[%s10 + $0x38] sm:$0xff]
  %v542 = vld [vmem:[%s10 + $0x40] sm:$0xff]
  %v543 = vld [vmem:[%s10 + $0x48] sm:$0xff]
  %v544 = vld [vmem:[%s10 + $0x50] sm:$0xff]
  %v545 = vld [vmem:[%s10 + $0x58] sm:$0xff]
  %v546 = vld [vmem:[%s10 + $0x60] sm:$0xff]
  %v547 = vld [vmem:[%s10 + $0x68] sm:$0xff]
  %v548 = vld [vmem:[%s10 + $0x70] sm:$0xff]
  %v549 = vld [vmem:[%s10 + $0x78] sm:$0xff]
  %v550 = vld [vmem:[#allocation2] sm:$0x1]
  %551 = vmatprep.subr.mxu0 0.0
  %552 = vmatpush1.msra.mxu0 %v517
  %553 = vmatprep.subr.mxu0 0.0
  %554 = vmatpush1.msra.mxu0 %v518
  %555 = vmatprep.subr.mxu0 0.0
  %556 = vmatpush1.msra.mxu0 %v519
  %557 = vmatprep.subr.mxu0 0.0
  %558 = vmatpush1.msra.mxu0 %v520
  %559 = vmatprep.subr.mxu0 0.0
  %560 = vmatpush1.msra.mxu0 %v521
  %561 = vmatprep.subr.mxu0 0.0
  %562 = vmatpush1.msra.mxu0 %v522
  %563 = vmatprep.subr.mxu0 0.0
  %564 = vmatpush1.msra.mxu0 %v523
  %565 = vmatprep.subr.mxu0 0.0
  %566 = vmatpush1.msra.mxu0 %v524
  %567 = vmatprep.subr.mxu0 0.0
  %568 = vmatpush1.msra.mxu0 %v525
  %569 = vmatprep.subr.mxu0 0.0
  %570 = vmatpush1.msra.mxu0 %v526
  %571 = vmatprep.subr.mxu0 0.0
  %572 = vmatpush1.msra.mxu0 %v527
  %573 = vmatprep.subr.mxu0 0.0
  %574 = vmatpush1.msra.mxu0 %v528
  %575 = vmatprep.subr.mxu0 0.0
  %576 = vmatpush1.msra.mxu0 %v529
  %577 = vmatprep.subr.mxu0 0.0
  %578 = vmatpush1.msra.mxu0 %v530
  %579 = vmatprep.subr.mxu0 0.0
  %580 = vmatpush1.msra.mxu0 %v531
  %581 = vmatprep.subr.mxu0 0.0
  %582 = vmatpush1.msra.mxu0 %v532
  %583 = vmatprep.subr.mxu0 0.0
  %584 = vmatpush1.msra.mxu0 0.0
  %585 = vmatprep.subr.mxu0 0.0
  %586 = vmatpush1.msra.mxu0 0.0
  %587 = vmatprep.subr.mxu0 0.0
  %588 = vmatpush1.msra.mxu0 0.0
  %589 = vmatprep.subr.mxu0 0.0
  %590 = vmatpush1.msra.mxu0 0.0
  %591 = vmatprep.subr.mxu0 0.0
  %592 = vmatpush1.msra.mxu0 0.0
  %593 = vmatprep.subr.mxu0 0.0
  %594 = vmatpush1.msra.mxu0 0.0
  %595 = vmatprep.subr.mxu0 0.0
  %596 = vmatpush1.msra.mxu0 0.0
  %597 = vmatprep.subr.mxu0 0.0
  %598 = vmatpush1.msra.mxu0 0.0
  %599 = vmatprep.subr.mxu0 0.0
  %600 = vmatpush1.msra.mxu0 0.0
  %601 = vmatprep.subr.mxu0 0.0
  %602 = vmatpush1.msra.mxu0 0.0
  %603 = vmatprep.subr.mxu0 0.0
  %604 = vmatpush1.msra.mxu0 0.0
  %605 = vmatprep.subr.mxu0 0.0
  %606 = vmatpush1.msra.mxu0 0.0
  %607 = vmatprep.subr.mxu0 0.0
  %608 = vmatpush1.msra.mxu0 0.0
  %609 = vmatprep.subr.mxu0 0.0
  %610 = vmatpush1.msra.mxu0 0.0
  %611 = vmatprep.subr.mxu0 0.0
  %612 = vmatpush1.msra.mxu0 0.0
  %613 = vmatprep.subr.mxu0 0.0
  %614 = vmatpush1.msra.mxu0 0.0
  %615 = vmatprep.mubr.f32.mxu0 0.0
  %616 = vmatmul.mubr.f32.gmra.mrb[0].mxu0 %v243
  %v617 = vpop.f32.mrb[0].mxu0
  %v618 = vadd.f32 0.0, %v617
  %v619 = vpop.f32.mrb[0].mxu0
  %620 = vmatprep.mubr.f32.mxu0 0.0
  %621 = vmatmul.mubr.f32.gmra.mrb[0].mxu0 %v244
  %v622 = vpop.f32.mrb[0].mxu0
  %v623 = vadd.f32 0.0, %v622
  %v624 = vpop.f32.mrb[0].mxu0
  %625 = vdwg.mxu0
  %627 = vset.pattern.permute.xlu0 0
  %628 = vperm.xlu0 %627, %v515
  %v629 = vpop.permute.xlu0 %628
  %632 = vset.pattern.permute.xlu0 0
  %633 = vperm.xlu0 %632, %v516
  %v634 = vpop.permute.xlu0 %633
  %v636 = vmul.f32 %v629, %v618
  %v637 = vmul.f32 %v634, %v623
  %v638 = vpack.c.bf16 %v637, %v636
  %639 = vmatprep.subr.bf16.mxu0 0
  %640 = vmatpush1.bf16.msra.mxu0 %v638
  %641 = vmatprep.subr.bf16.mxu0 0
  %642 = vmatpush1.bf16.msra.mxu0 0
  %643 = vmatprep.subr.bf16.mxu0 0
  %644 = vmatpush1.bf16.msra.mxu0 0
  %645 = vmatprep.subr.bf16.mxu0 0
  %646 = vmatpush1.bf16.msra.mxu0 0
  %647 = vmatprep.subr.bf16.mxu0 0
  %648 = vmatpush1.bf16.msra.mxu0 0
  %649 = vmatprep.subr.bf16.mxu0 0
  %650 = vmatpush1.bf16.msra.mxu0 0
  %651 = vmatprep.subr.bf16.mxu0 0
  %652 = vmatpush1.bf16.msra.mxu0 0
  %653 = vmatprep.subr.bf16.mxu0 0
  %654 = vmatpush1.bf16.msra.mxu0 0
  %655 = vmatprep.subr.bf16.mxu0 0
  %656 = vmatpush1.bf16.msra.mxu0 0
  %657 = vmatprep.subr.bf16.mxu0 0
  %658 = vmatpush1.bf16.msra.mxu0 0
  %659 = vmatprep.subr.bf16.mxu0 0
  %660 = vmatpush1.bf16.msra.mxu0 0
  %661 = vmatprep.subr.bf16.mxu0 0
  %662 = vmatpush1.bf16.msra.mxu0 0
  %663 = vmatprep.subr.bf16.mxu0 0
  %664 = vmatpush1.bf16.msra.mxu0 0
  %665 = vmatprep.subr.bf16.mxu0 0
  %666 = vmatpush1.bf16.msra.mxu0 0
  %667 = vmatprep.subr.bf16.mxu0 0
  %668 = vmatpush1.bf16.msra.mxu0 0
  %669 = vmatprep.subr.bf16.mxu0 0
  %670 = vmatpush1.bf16.msra.mxu0 0
  %671 = vmatprep.mubr.bf16.mxu0 0
  %672 = vmatmul.mubr.bf16.gmra.mrb[0].mxu0 %v466
  %v673 = vpop.f32.mrb[0].mxu0
  %v674 = vadd.f32 %v636, %v673
  %v675 = vpop.f32.mrb[0].mxu0
  %v676 = vpop.f32.mrb[0].mxu0
  %v677 = vadd.f32 %v637, %v676
  %v678 = vpop.f32.mrb[0].mxu0
  %679 = vdwg.mxu0
  %v680 = vmul.f32 %v629, %v674
  %v681 = vmul.f32 %v634, %v677
  %v683 = vlaneseq
  %v684 = vshrl.u32 %v683, 7
  %v685 = vsub.s32 0, %v684
  %v686 = vrot.slane %v533, %v685
  %v688 = vadd.f32 %v680, %v686
  %v689 = vadd.f32 %v681, %v686
  %v690 = vmax.f32 %v688, 0.0
  %v691 = vmax.f32 %v689, 0.0
  %692 = vmatprep.subr.mxu0 0.0
  %693 = vmatpush1.msra.mxu0 %v534
  %694 = vmatprep.subr.mxu0 0.0
  %695 = vmatpush1.msra.mxu0 %v535
  %696 = vmatprep.subr.mxu0 0.0
  %697 = vmatpush1.msra.mxu0 %v536
  %698 = vmatprep.subr.mxu0 0.0
  %699 = vmatpush1.msra.mxu0 %v537
  %700 = vmatprep.subr.mxu0 0.0
  %701 = vmatpush1.msra.mxu0 %v538
  %702 = vmatprep.subr.mxu0 0.0
  %703 = vmatpush1.msra.mxu0 %v539
  %704 = vmatprep.subr.mxu0 0.0
  %705 = vmatpush1.msra.mxu0 %v540
  %706 = vmatprep.subr.mxu0 0.0
  %707 = vmatpush1.msra.mxu0 %v541
  %708 = vmatprep.subr.mxu0 0.0
  %709 = vmatpush1.msra.mxu0 %v542
  %710 = vmatprep.subr.mxu0 0.0
  %711 = vmatpush1.msra.mxu0 %v543
  %712 = vmatprep.subr.mxu0 0.0
  %713 = vmatpush1.msra.mxu0 %v544
  %714 = vmatprep.subr.mxu0 0.0
  %715 = vmatpush1.msra.mxu0 %v545
  %716 = vmatprep.subr.mxu0 0.0
  %717 = vmatpush1.msra.mxu0 %v546
  %718 = vmatprep.subr.mxu0 0.0
  %719 = vmatpush1.msra.mxu0 %v547
  %720 = vmatprep.subr.mxu0 0.0
  %721 = vmatpush1.msra.mxu0 %v548
  %722 = vmatprep.subr.mxu0 0.0
  %723 = vmatpush1.msra.mxu0 %v549
  %724 = vmatprep.subr.mxu0 0.0
  %725 = vmatpush1.msra.mxu0 0.0
  %726 = vmatprep.subr.mxu0 0.0
  %727 = vmatpush1.msra.mxu0 0.0
  %728 = vmatprep.subr.mxu0 0.0
  %729 = vmatpush1.msra.mxu0 0.0
  %730 = vmatprep.subr.mxu0 0.0
  %731 = vmatpush1.msra.mxu0 0.0
  %732 = vmatprep.subr.mxu0 0.0
  %733 = vmatpush1.msra.mxu0 0.0
  %734 = vmatprep.subr.mxu0 0.0
  %735 = vmatpush1.msra.mxu0 0.0
  %736 = vmatprep.subr.mxu0 0.0
  %737 = vmatpush1.msra.mxu0 0.0
  %738 = vmatprep.subr.mxu0 0.0
  %739 = vmatpush1.msra.mxu0 0.0
  %740 = vmatprep.subr.mxu0 0.0
  %741 = vmatpush1.msra.mxu0 0.0
  %742 = vmatprep.subr.mxu0 0.0
  %743 = vmatpush1.msra.mxu0 0.0
  %744 = vmatprep.subr.mxu0 0.0
  %745 = vmatpush1.msra.mxu0 0.0
  %746 = vmatprep.subr.mxu0 0.0
  %747 = vmatpush1.msra.mxu0 0.0
  %748 = vmatprep.subr.mxu0 0.0
  %749 = vmatpush1.msra.mxu0 0.0
  %750 = vmatprep.subr.mxu0 0.0
  %751 = vmatpush1.msra.mxu0 0.0
  %752 = vmatprep.subr.mxu0 0.0
  %753 = vmatpush1.msra.mxu0 0.0
  %754 = vmatprep.subr.mxu0 0.0
  %755 = vmatpush1.msra.mxu0 0.0
  %756 = vmatprep.mubr.f32.mxu0 0.0
  %757 = vmatmul.mubr.f32.gmra.mrb[0].mxu0 %v690
  %v758 = vpop.f32.mrb[0].mxu0
  %v759 = vadd.f32 0.0, %v758
  %v760 = vpop.f32.mrb[0].mxu0
  %761 = vmatprep.mubr.f32.mxu0 0.0
  %762 = vmatmul.mubr.f32.gmra.mrb[0].mxu0 %v691
  %v763 = vpop.f32.mrb[0].mxu0
  %v764 = vadd.f32 0.0, %v763
  %v765 = vpop.f32.mrb[0].mxu0
  %766 = vdwg.mxu0
  %v767 = vmul.f32 %v515, %v759
  %v768 = vmul.f32 %v516, %v764
  %v769 = vpack.c.bf16 %v768, %v767
  %770 = vmatprep.subr.bf16.mxu0 0
  %771 = vmatpush1.bf16.msra.mxu0 %v769
  %772 = vmatprep.subr.bf16.mxu0 0
  %773 = vmatpush1.bf16.msra.mxu0 0
  %774 = vmatprep.subr.bf16.mxu0 0
  %775 = vmatpush1.bf16.msra.mxu0 0
  %776 = vmatprep.subr.bf16.mxu0 0
  %777 = vmatpush1.bf16.msra.mxu0 0
  %778 = vmatprep.subr.bf16.mxu0 0
  %779 = vmatpush1.bf16.msra.mxu0 0
  %780 = vmatprep.subr.bf16.mxu0 0
  %781 = vmatpush1.bf16.msra.mxu0 0
  %782 = vmatprep.subr.bf16.mxu0 0
  %783 = vmatpush1.bf16.msra.mxu0 0
  %784 = vmatprep.subr.bf16.mxu0 0
  %785 = vmatpush1.bf16.msra.mxu0 0
  %786 = vmatprep.subr.bf16.mxu0 0
  %787 = vmatpush1.bf16.msra.mxu0 0
  %788 = vmatprep.subr.bf16.mxu0 0
  %789 = vmatpush1.bf16.msra.mxu0 0
  %790 = vmatprep.subr.bf16.mxu0 0
  %791 = vmatpush1.bf16.msra.mxu0 0
  %792 = vmatprep.subr.bf16.mxu0 0
  %793 = vmatpush1.bf16.msra.mxu0 0
  %794 = vmatprep.subr.bf16.mxu0 0
  %795 = vmatpush1.bf16.msra.mxu0 0
  %796 = vmatprep.subr.bf16.mxu0 0
  %797 = vmatpush1.bf16.msra.mxu0 0
  %798 = vmatprep.subr.bf16.mxu0 0
  %799 = vmatpush1.bf16.msra.mxu0 0
  %800 = vmatprep.subr.bf16.mxu0 0
  %801 = vmatpush1.bf16.msra.mxu0 0
  %802 = vmatprep.mubr.bf16.mxu0 0
  %803 = vmatmul.mubr.bf16.gmra.mrb[0].mxu0 %v466
  %v804 = vpop.f32.mrb[0].mxu0
  %v805 = vadd.f32 %v767, %v804
  %v806 = vpop.f32.mrb[0].mxu0
  %v807 = vpop.f32.mrb[0].mxu0
  %v808 = vadd.f32 %v768, %v807
  %v809 = vpop.f32.mrb[0].mxu0
  %810 = vdwg.mxu0
  %v811 = vmul.f32 %v515, %v805
  %v812 = vmul.f32 %v516, %v808
  %v814 = vlaneseq
  %v815 = vshrl.u32 %v814, 7
  %v816 = vsub.s32 0, %v815
  %v817 = vrot.slane %v550, %v816
  %v819 = vadd.f32 %v811, %v817
  %v820 = vadd.f32 %v812, %v817
  %v821 = vpack.c.bf16 %v691, %v690
  %v823 = vunpack.c.l.b16 %v821
  %v824 = vunpack.c.h.b16 %v821
  %v825 = vpack.c.b16 %v823, %v823
  %v826 = vpack.c.b16 %v824, %v824
  %829 = vst [vmem:[%s14] sm:$0xf] %v825
  %830 = vst [vmem:[%s14 + $0x4] sm:$0xf] %v826
  %831 = vst.msk [vmem:[%s15] sm:$0xff] %vm456, %v819
  %832 = vst.msk [vmem:[%s15 + $0x8] sm:$0xff] %vm456, %v820
  // Predicated region
  $region50: #{net_forward.5} parent=0 // pred_check
    _
  $region51: #{net_forward.5} parent=0 // pred_check_branch
    %834 = sbr.rel (0) target = $region53
  $region52: #{net_forward.5} parent=0 // pred_region
    _
  $region53: #{net_forward.5} parent=0 // pred_fallthru
    _
  // Predicated region
  $region54: #{net_forward.5} parent=0 // pred_check
    _
  $region55: #{net_forward.5} parent=0 // pred_check_branch
    %836 = sbr.rel (0) target = $region57
  $region56: #{net_forward.5} parent=0 // pred_region
    _
  $region57: #{net_forward.5} parent=0 // pred_fallthru
    _
  // Predicated region
  $region58: #{net_forward.5} parent=0 // pred_check
    _
  $region59: #{net_forward.5} parent=0 // pred_check_branch
    %838 = sbr.rel (0) target = $region61
  $region60: #{net_forward.5} parent=0 // pred_region
    _
  $region61: #{net_forward.5} parent=0 // pred_fallthru
    _
  // Predicated region
  $region62: #{net_forward.5} parent=0 // pred_check
    _
  $region63: #{net_forward.5} parent=0 // pred_check_branch
    %840 = sbr.rel (0) target = $region65
  $region64: #{net_forward.5} parent=0 // pred_region
    _
  $region65: #{net_forward.5} parent=0 // pred_fallthru
    _
  // Predicated region
  $region66: #{net_forward.5} parent=0 // pred_check
    _
  $region67: #{net_forward.5} parent=0 // pred_check_branch
    %842 = sbr.rel (0) target = $region69
  $region68: #{net_forward.5} parent=0 // pred_region
    _
  $region69: #{net_forward.5} parent=0 // pred_fallthru
    _
  // Predicated region
  $region70: #{net_forward.5} parent=0 // pred_check
    _
  $region71: #{net_forward.5} parent=0 // pred_check_branch
    %844 = sbr.rel (0) target = $region73
  $region72: #{net_forward.5} parent=0 // pred_region
    _
  $region73: #{net_forward.5} parent=0 // pred_fallthru
    _
  // Predicated region
  $region74: #{net_forward.5} parent=0 // pred_check
    _
  $region75: #{net_forward.5} parent=0 // pred_check_branch
    %846 = sbr.rel (0) target = $region77
  $region76: #{net_forward.5} parent=0 // pred_region
    _
  $region77: #{net_forward.5} parent=0 // pred_fallthru
    _
  // Predicated region
  $region78: #{net_forward.5} parent=0 // pred_check
    _
  $region79: #{net_forward.5} parent=0 // pred_check_branch
    %848 = sbr.rel (0) target = $region81
  $region80: #{net_forward.5} parent=0 // pred_region
    _
  $region81: #{net_forward.5} parent=0 // pred_fallthru
    _
  // Predicated region
  $region82: #{net_forward.5} parent=0 // pred_check
    _
  $region83: #{net_forward.5} parent=0 // pred_check_branch
    %850 = sbr.rel (0) target = $region85
  $region84: #{net_forward.5} parent=0 // pred_region
    _
  $region85: #{net_forward.5} parent=0 // pred_fallthru
    _
  // Predicated region
  $region86: #{net_forward.5} parent=0 // pred_check
    _
  $region87: #{net_forward.5} parent=0 // pred_check_branch
    %852 = sbr.rel (0) target = $region89
  $region88: #{net_forward.5} parent=0 // pred_region
    _
  $region89: #{net_forward.5} parent=0 // pred_fallthru
    _

</llo_original>
